<compile_context>
chip_gen: v7x
topology: tpu7x:2x2x1
jax: 0.10.0
libtpu: 0.0.40
codegen_flags: <defaults>
</compile_context>

<pallas_src>
import jax
import jax.numpy as jnp
from jax.experimental import pallas as pl
from jax.experimental.pallas import tpu as pltpu


def _round_up(n, m):
    return ((n + m - 1) // m) * m


def _mlp_kernel(x_ref, w1_ref, b1_ref, w2_ref, b2_ref, w3_ref, b3_ref, o_ref):
    # Layer 1: Linear + ReLU        x: [tb, D0] @ W1: [D0, D1]
    h = jnp.dot(x_ref[...], w1_ref[...], preferred_element_type=jnp.float32)
    h = jnp.maximum(h + b1_ref[...], 0.0)
    # Layer 2: Linear + ReLU        h: [tb, D1] @ W2: [D1, D2]
    h = jnp.dot(h, w2_ref[...], preferred_element_type=jnp.float32)
    h = jnp.maximum(h + b2_ref[...], 0.0)
    # Output layer: Linear(., 1) + Sigmoid.  N=1, so use a VPU multiply + lane
    # reduction instead of an MXU pass over h.T (no XLU transpose of h).
    logits = jnp.sum(h * w3_ref[...], axis=-1, keepdims=True) + b3_ref[0, 0]
    o_ref[...] = jax.nn.sigmoid(logits).astype(o_ref.dtype)


def prepare_params(params):
    """One-time layout conversion, hoisted out of the per-call path."""
    f32 = jnp.float32
    return dict(
        w1=params["w1"].astype(f32),                      # [D0, D1]
        b1=params["b1"].astype(f32),                      # [1, D1]
        w2=params["w2"].astype(f32),                      # [D1, D2]
        b2=params["b2"].astype(f32),                      # [1, D2]
        w3_row=params["w3"].astype(f32).reshape(1, -1),   # [D2, 1] -> [1, D2]
        b3=params["b3"].astype(f32).reshape(1, 1),        # SMEM scalar
    )


def feedforward_flexible(x, prepared, *, tb=1024):
    """Fused forward of FeedforwardFlexible(h_sizes, ReLU, num_class=1).

    x: [B, D0] float; prepared = prepare_params(raw_params).
    Returns [B, 1] float32 sigmoid probabilities.
    """
    B, D0 = x.shape
    w1, b1 = prepared["w1"], prepared["b1"]
    w2, b2 = prepared["w2"], prepared["b2"]
    w3_row, b3 = prepared["w3_row"], prepared["b3"]
    D1, D2 = w1.shape[1], w2.shape[1]
    assert w1.shape[0] == D0 and w2.shape[0] == D1 and w3_row.shape == (1, D2)

    # Batch tile: multiple of 128 (sublane-friendly, amortizes the ~0.35us
    # fixed per-grid-step cost), capped so there are >=2 grid steps whenever B
    # allows it (keeps both v7x TensorCores busy on the "parallel" axis).
    tb = max(128, _round_up(min(tb, pl.cdiv(B, 2)), 128))
    n_tiles = pl.cdiv(B, tb)

    x = x.astype(jnp.float32)
    const = lambda i: (0, 0)  # weight/bias blocks: same tile every step

    return pl.pallas_call(
        _mlp_kernel,
        out_shape=jax.ShapeDtypeStruct((B, 1), jnp.float32),
        grid_spec=pltpu.PrefetchScalarGridSpec(
            num_scalar_prefetch=0,
            grid=(n_tiles,),
            in_specs=[
                pl.BlockSpec((tb, D0), lambda i: (i, 0)),            # x tile (native D0)
                pl.BlockSpec((D0, D1), const),                       # W1
                pl.BlockSpec((1, D1), const),                        # b1
                pl.BlockSpec((D1, D2), const),                       # W2
                pl.BlockSpec((1, D2), const),                        # b2
                pl.BlockSpec((1, D2), const),                        # W3 row
                pl.BlockSpec(memory_space=pltpu.MemorySpace.SMEM),   # b3 scalar
            ],
            out_specs=pl.BlockSpec((tb, 1), lambda i: (i, 0)),       # [tb,1] column
        ),
        compiler_params=pltpu.CompilerParams(
            dimension_semantics=("parallel",),
        ),
    )(x, w1, b1, w2, b2, w3_row, b3)


def init_params(key, h_sizes):
    """Deterministic init mirroring torch.nn.Linear defaults (U(-1/sqrt(fan_in), +))."""
    dims = list(h_sizes) + [1]
    params = {}
    for k in range(len(dims) - 1):
        fan_in, fan_out = dims[k], dims[k + 1]
        key, kw, kb = jax.random.split(key, 3)
        bound = 1.0 / jnp.sqrt(fan_in)
        # PyTorch stores weight as [out, in]; we keep the transposed [in, out]
        # so the kernel computes x @ W directly.
        w = jax.random.uniform(kw, (fan_in, fan_out), jnp.float32, -bound, bound)
        b = jax.random.uniform(kb, (1, fan_out), jnp.float32, -bound, bound)
        params[f"w{k + 1}"] = w
        params[f"b{k + 1}"] = b
    return params


def reference_forward(x, params):
    h = jnp.maximum(x @ params["w1"] + params["b1"], 0.0)
    h = jnp.maximum(h @ params["w2"] + params["b2"], 0.0)
    # HIGHEST on the width-1 output dot so the reference matches the kernel's
    # exact-f32 VPU reduction regardless of the backend's default matmul precision.
    logits = jnp.dot(h, params["w3"], precision=jax.lax.Precision.HIGHEST) + params["b3"]
    return jax.nn.sigmoid(logits)


if __name__ == "__main__":
    # Small, module-consistent shapes: h_sizes = [32, 64, 32], num_class = 1.
    h_sizes = (32, 64, 32)
    batch = 300   # deliberately NOT a multiple of the tile: exercises the partial tile

    key = jax.random.PRNGKey(0)
    key, kx = jax.random.split(key)
    x = jax.random.normal(kx, (batch, h_sizes[0]), jnp.float32)
    params = init_params(key, h_sizes)

    prepared = prepare_params(params)            # one-time layout work, hoisted
    fwd = jax.jit(lambda xx, pp: feedforward_flexible(xx, pp, tb=1024))

    out = jax.block_until_ready(fwd(x, prepared))   # tb caps to 256 -> 2 parallel steps

    ref = reference_forward(x, params)
    assert out.shape == (batch, 1)
    # Tolerance leaves margin for matmul-precision differences between the
    # in-kernel MXU path and the XLA reference; real bugs are O(1e-1).
    assert jnp.allclose(out, ref, atol=1e-4, rtol=1e-4), "mismatch vs JAX reference"

    print("KERNEL_OK")
</pallas_src>

<mosaic_0001>
module attributes {stable_mosaic.version = 11 : i64} {
  func.func @_mlp_kernel(%arg0: i32, %arg1: memref<256x32xf32, #tpu.memory_space<vmem>>, %arg2: memref<32x64xf32, #tpu.memory_space<vmem>>, %arg3: memref<1x64xf32, #tpu.memory_space<vmem>>, %arg4: memref<64x32xf32, #tpu.memory_space<vmem>>, %arg5: memref<1x32xf32, #tpu.memory_space<vmem>>, %arg6: memref<1x32xf32, #tpu.memory_space<vmem>>, %arg7: memref<1x1xf32, #tpu.memory_space<smem>>, %arg8: memref<256x1xf32, #tpu.memory_space<vmem>>) attributes {dimension_semantics = [#tpu.dimension_semantics<parallel>], iteration_bounds = array<i64: 2>, scalar_prefetch = 0 : i64, scratch_operands = 0 : i64, tpu.core_type = #tpu.core_type<tc>, window_params = [{transform_indices = @transform_0, window_bounds = array<i64: 256, 32>}, {pipeline_mode = #tpu.pipeline_mode<synchronous>, transform_indices = @transform_1, window_bounds = array<i64: 32, 64>}, {pipeline_mode = #tpu.pipeline_mode<synchronous>, transform_indices = @transform_2, window_bounds = array<i64: 1, 64>}, {pipeline_mode = #tpu.pipeline_mode<synchronous>, transform_indices = @transform_3, window_bounds = array<i64: 64, 32>}, {pipeline_mode = #tpu.pipeline_mode<synchronous>, transform_indices = @transform_4, window_bounds = array<i64: 1, 32>}, {pipeline_mode = #tpu.pipeline_mode<synchronous>, transform_indices = @transform_5, window_bounds = array<i64: 1, 32>}, {transform_indices = @transform_6, window_bounds = array<i64: 1, 1>}, {transform_indices = @transform_7, window_bounds = array<i64: 256, 1>}]} {
    %c0 = arith.constant 0 : index
    %c0_0 = arith.constant 0 : index
    %0 = vector.load %arg1[%c0, %c0_0] : memref<256x32xf32, #tpu.memory_space<vmem>>, vector<256x32xf32>
    %c0_1 = arith.constant 0 : index
    %c0_2 = arith.constant 0 : index
    %1 = vector.load %arg2[%c0_1, %c0_2] : memref<32x64xf32, #tpu.memory_space<vmem>>, vector<32x64xf32>
    %cst = arith.constant dense<0.000000e+00> : vector<256x64xf32>
    %2 = tpu.matmul %0, %1, %cst {dimension_numbers = #tpu.dot_dimension_numbers<[1], [0], [0], [1], [0, 0, 1, 1], [], []>} : vector<256x32xf32>, vector<32x64xf32>, vector<256x64xf32> -> vector<256x64xf32>
    %c0_3 = arith.constant 0 : index
    %c0_4 = arith.constant 0 : index
    %3 = vector.load %arg3[%c0_3, %c0_4] : memref<1x64xf32, #tpu.memory_space<vmem>>, vector<1x64xf32>
    %4 = vector.broadcast %3 : vector<1x64xf32> to vector<256x64xf32>
    %5 = arith.addf %2, %4 : vector<256x64xf32>
    %cst_5 = arith.constant 0.000000e+00 : f32
    %6 = vector.broadcast %cst_5 : f32 to vector<256x64xf32>
    %7 = arith.maximumf %5, %6 : vector<256x64xf32>
    %c0_6 = arith.constant 0 : index
    %c0_7 = arith.constant 0 : index
    %8 = vector.load %arg4[%c0_6, %c0_7] : memref<64x32xf32, #tpu.memory_space<vmem>>, vector<64x32xf32>
    %cst_8 = arith.constant dense<0.000000e+00> : vector<256x32xf32>
    %9 = tpu.matmul %7, %8, %cst_8 {dimension_numbers = #tpu.dot_dimension_numbers<[1], [0], [0], [1], [0, 0, 1, 1], [], []>} : vector<256x64xf32>, vector<64x32xf32>, vector<256x32xf32> -> vector<256x32xf32>
    %c0_9 = arith.constant 0 : index
    %c0_10 = arith.constant 0 : index
    %10 = vector.load %arg5[%c0_9, %c0_10] : memref<1x32xf32, #tpu.memory_space<vmem>>, vector<1x32xf32>
    %11 = vector.broadcast %10 : vector<1x32xf32> to vector<256x32xf32>
    %12 = arith.addf %9, %11 : vector<256x32xf32>
    %cst_11 = arith.constant 0.000000e+00 : f32
    %13 = vector.broadcast %cst_11 : f32 to vector<256x32xf32>
    %14 = arith.maximumf %12, %13 : vector<256x32xf32>
    %c0_12 = arith.constant 0 : index
    %c0_13 = arith.constant 0 : index
    %15 = vector.load %arg6[%c0_12, %c0_13] : memref<1x32xf32, #tpu.memory_space<vmem>>, vector<1x32xf32>
    %16 = vector.broadcast %15 : vector<1x32xf32> to vector<256x32xf32>
    %17 = arith.mulf %14, %16 : vector<256x32xf32>
    %cst_14 = arith.constant dense<0.000000e+00> : vector<256xf32>
    %18 = vector.multi_reduction <add>, %17, %cst_14 [1] : vector<256x32xf32> to vector<256xf32>
    %19 = vector.shape_cast %18 : vector<256xf32> to vector<256x1xf32>
    %c0_15 = arith.constant 0 : index
    %c0_16 = arith.constant 0 : index
    %20 = memref.load %arg7[%c0_15, %c0_16] : memref<1x1xf32, #tpu.memory_space<smem>>
    %21 = vector.broadcast %20 : f32 to vector<256x1xf32>
    %22 = arith.addf %19, %21 : vector<256x1xf32>
    %23 = arith.negf %22 : vector<256x1xf32>
    %24 = math.exp %23 : vector<256x1xf32>
    %cst_17 = arith.constant 1.000000e+00 : f32
    %25 = vector.broadcast %cst_17 : f32 to vector<256x1xf32>
    %26 = arith.addf %25, %24 : vector<256x1xf32>
    %27 = arith.divf %25, %26 : vector<256x1xf32>
    %c0_18 = arith.constant 0 : index
    %c0_19 = arith.constant 0 : index
    %28 = vector.load %arg8[%c0_18, %c0_19] : memref<256x1xf32, #tpu.memory_space<vmem>>, vector<256x1xf32>
    tpu.vector_store %arg8[%c0_18, %c0_19], %27 {strides = array<i32>} : memref<256x1xf32, #tpu.memory_space<vmem>>, vector<256x1xf32>,
    return
  }
  func.func @transform_0(%arg0: i32) -> (i32, i32) {
    %c0_i32 = arith.constant 0 : i32
    %c0_i32_0 = arith.constant 0 : i32
    return %arg0, %c0_i32 : i32, i32
  }
  func.func @transform_1(%arg0: i32) -> (i32, i32) {
    %c0_i32 = arith.constant 0 : i32
    %c0_i32_0 = arith.constant 0 : i32
    %c0_i32_1 = arith.constant 0 : i32
    return %c0_i32, %c0_i32_0 : i32, i32
  }
  func.func @transform_2(%arg0: i32) -> (i32, i32) {
    %c0_i32 = arith.constant 0 : i32
    %c0_i32_0 = arith.constant 0 : i32
    %c0_i32_1 = arith.constant 0 : i32
    return %c0_i32, %c0_i32_0 : i32, i32
  }
  func.func @transform_3(%arg0: i32) -> (i32, i32) {
    %c0_i32 = arith.constant 0 : i32
    %c0_i32_0 = arith.constant 0 : i32
    %c0_i32_1 = arith.constant 0 : i32
    return %c0_i32, %c0_i32_0 : i32, i32
  }
  func.func @transform_4(%arg0: i32) -> (i32, i32) {
    %c0_i32 = arith.constant 0 : i32
    %c0_i32_0 = arith.constant 0 : i32
    %c0_i32_1 = arith.constant 0 : i32
    return %c0_i32, %c0_i32_0 : i32, i32
  }
  func.func @transform_5(%arg0: i32) -> (i32, i32) {
    %c0_i32 = arith.constant 0 : i32
    %c0_i32_0 = arith.constant 0 : i32
    %c0_i32_1 = arith.constant 0 : i32
    return %c0_i32, %c0_i32_0 : i32, i32
  }
  func.func @transform_6(%arg0: i32) -> (i32, i32) {
    %c0_i32 = arith.constant 0 : i32
    %c0_i32_0 = arith.constant 0 : i32
    %c0_i32_1 = arith.constant 0 : i32
    return %c0_i32, %c0_i32_0 : i32, i32
  }
  func.func @transform_7(%arg0: i32) -> (i32, i32) {
    %c0_i32 = arith.constant 0 : i32
    %c0_i32_0 = arith.constant 0 : i32
    return %arg0, %c0_i32 : i32, i32
  }
}

</mosaic_0001>

<llo_original>
// kernel: _lambda_.1
$region0: #{_lambda_.1}
  #allocation0 [shape = 'u32[]', space=smem, size = 0x4, offset = 0x4, fixed_abs, tag = 'smem constant byte address 0x4 - core index']
  #allocation1 [shape = 'u32[144,128]{1,0:T(1,128)}', space=vmem, size = 0x12000, scoped, tag = 'internal scratch']
  #allocation2 [shape = 'f32[1,1]{1,0:T(1,128)S(6)}', space=smem, size = 0x200, scoped, tag = 'scoped memory for _lambda_.1']
  %s0 = inlined_call_operand.vmem [shape: f32[300,32], index: 0, kind: input, shape index: {}]
  %s1 = inlined_call_operand.vmem [shape: f32[32,64], index: 1, kind: input, shape index: {}]
  %s2 = inlined_call_operand.vmem [shape: f32[1,64], index: 2, kind: input, shape index: {}]
  %s3 = inlined_call_operand.vmem [shape: f32[64,32], index: 3, kind: input, shape index: {}]
  %s4 = inlined_call_operand.vmem [shape: f32[1,32], index: 4, kind: input, shape index: {}]
  %s5 = inlined_call_operand.vmem [shape: f32[1,32], index: 5, kind: input, shape index: {}]
  %s6 = inlined_call_operand.<no memory space> [shape: f32[1,1], index: 6, kind: input, shape index: {}]
  %s7 = inlined_call_operand.vmem [shape: f32[300,1], index: 7, kind: output, shape index: {}]
  %s8 = sld [smem:[#allocation0]]
  $region109: #{_lambda_.1} parent=0
    _
  %s10 = ssub.s32 1, %s8
  %s11 = scalar_select 0, %s10, %s8
  %12 = sst [smem:[#allocation2]] %s6
  $region1: #{_lambda_.1} parent=0
    #allocation3 [shape = 'u8[262144]{0}', space=vmem, size = 0x40000, scoped, tag = 'output window, operand 0']
    loop: start=0, step=1, limit=4
    $region2: #{_lambda_.1} parent=1 // loop_pre_header
      _
    $region3: #{_lambda_.1} parent=1 // loop_header
      %s14 = sphi 0, %s18
      %p15 = scmp.ge.s32.totalorder %s14, 4
      %s24 = sphi 0, %s26
      %s27 = sphi 0, %s24
      %s28 = sphi 0, %s27
      %s44 = sphi 0, %s28
      %s48 = sphi 0, %s48
      %s50 = sphi 0, %s48
      %s51 = sphi 0, %s50
      %s65 = sphi 0, %s51
      %s69 = sphi 0, %s69
      %s71 = sphi 0, %s69
      %s72 = sphi 0, %s71
      %s86 = sphi 0, %s72
      %s90 = sphi 0, %s90
      %s92 = sphi 0, %s90
      %s93 = sphi 0, %s92
      %s107 = sphi 0, %s93
      %s111 = sphi 0, %s111
      %s113 = sphi 0, %s111
      %s114 = sphi 0, %s113
      %s128 = sphi 0, %s114
      %s132 = sphi 0, %s132
      %s134 = sphi 0, %s132
      %s135 = sphi 0, %s134
      %s149 = sphi 0, %s135
      %s153 = sphi 0, %s153
      %s155 = sphi 0, %s153
      %s156 = sphi 0, %s155
      %s170 = sphi 0, %s156
      %s176 = sphi 0, %s178
      %s179 = sphi 0, %s176
      %s180 = sphi 0, %s179
      %s196 = sphi 0, %s180
    $region4: #{_lambda_.1} parent=1 // loop_header_branch
      %17 = sbr.rel (%p15) target = $region8
    $region5: #{_lambda_.1} parent=1 // loop_body
      %s19 = ssub.s32 %s14, 1
      %s20 = ssub.s32 %s14, 2
      %s21 = sadd.s32 %s14, 1
      %s22 = ssub.s32 %s14, %s21
      %p23 = scmp.eq.s32.totalorder %s22, 0
      %s25 = sadd.s32 %s24, 1
      %s26 = scalar_select %p23, %s24, %s25
      %p29 = pneg %p23
      %p30 = scmp.eq.s32.totalorder %s14, 1
      %p31 = por %p29, %p30
      %p32 = scmp.ne.s32.totalorder %s24, %s27
      %p33 = scmp.eq.s32.totalorder %s14, 0
      %p34 = por %p32, %p33
      %p35 = scmp.ne.s32.totalorder %s24, %s27
      %p36 = scmp.eq.s32.totalorder %s19, 1
      %p37 = por %p35, %p36
      %p38 = scmp.ne.s32.totalorder %s27, %s28
      %p39 = scmp.eq.s32.totalorder %s19, 0
      %p40 = por %p38, %p39
      %p41 = scmp.ne.s32.totalorder %s27, %s28
      %p42 = scmp.eq.s32.totalorder %s20, 1
      %p43 = por %p41, %p42
      %p45 = scmp.ne.s32.totalorder %s28, %s44
      %p46 = scmp.eq.s32.totalorder %s20, 0
      %p47 = por %p45, %p46
      %s49 = sadd.s32 %s48, 1
      %p52 = scmp.eq.s32.totalorder %s14, 1
      %p53 = scmp.ne.s32.totalorder %s48, %s50
      %p54 = scmp.eq.s32.totalorder %s14, 0
      %p55 = por %p53, %p54
      %p56 = scmp.ne.s32.totalorder %s48, %s50
      %p57 = scmp.eq.s32.totalorder %s19, 1
      %p58 = por %p56, %p57
      %p59 = scmp.ne.s32.totalorder %s50, %s51
      %p60 = scmp.eq.s32.totalorder %s19, 0
      %p61 = por %p59, %p60
      %p62 = scmp.ne.s32.totalorder %s50, %s51
      %p63 = scmp.eq.s32.totalorder %s20, 1
      %p64 = por %p62, %p63
      %p66 = scmp.ne.s32.totalorder %s51, %s65
      %p67 = scmp.eq.s32.totalorder %s20, 0
      %p68 = por %p66, %p67
      %s70 = sadd.s32 %s69, 1
      %p73 = scmp.eq.s32.totalorder %s14, 1
      %p74 = scmp.ne.s32.totalorder %s69, %s71
      %p75 = scmp.eq.s32.totalorder %s14, 0
      %p76 = por %p74, %p75
      %p77 = scmp.ne.s32.totalorder %s69, %s71
      %p78 = scmp.eq.s32.totalorder %s19, 1
      %p79 = por %p77, %p78
      %p80 = scmp.ne.s32.totalorder %s71, %s72
      %p81 = scmp.eq.s32.totalorder %s19, 0
      %p82 = por %p80, %p81
      %p83 = scmp.ne.s32.totalorder %s71, %s72
      %p84 = scmp.eq.s32.totalorder %s20, 1
      %p85 = por %p83, %p84
      %p87 = scmp.ne.s32.totalorder %s72, %s86
      %p88 = scmp.eq.s32.totalorder %s20, 0
      %p89 = por %p87, %p88
      %s91 = sadd.s32 %s90, 1
      %p94 = scmp.eq.s32.totalorder %s14, 1
      %p95 = scmp.ne.s32.totalorder %s90, %s92
      %p96 = scmp.eq.s32.totalorder %s14, 0
      %p97 = por %p95, %p96
      %p98 = scmp.ne.s32.totalorder %s90, %s92
      %p99 = scmp.eq.s32.totalorder %s19, 1
      %p100 = por %p98, %p99
      %p101 = scmp.ne.s32.totalorder %s92, %s93
      %p102 = scmp.eq.s32.totalorder %s19, 0
      %p103 = por %p101, %p102
      %p104 = scmp.ne.s32.totalorder %s92, %s93
      %p105 = scmp.eq.s32.totalorder %s20, 1
      %p106 = por %p104, %p105
      %p108 = scmp.ne.s32.totalorder %s93, %s107
      %p109 = scmp.eq.s32.totalorder %s20, 0
      %p110 = por %p108, %p109
      %s112 = sadd.s32 %s111, 1
      %p115 = scmp.eq.s32.totalorder %s14, 1
      %p116 = scmp.ne.s32.totalorder %s111, %s113
      %p117 = scmp.eq.s32.totalorder %s14, 0
      %p118 = por %p116, %p117
      %p119 = scmp.ne.s32.totalorder %s111, %s113
      %p120 = scmp.eq.s32.totalorder %s19, 1
      %p121 = por %p119, %p120
      %p122 = scmp.ne.s32.totalorder %s113, %s114
      %p123 = scmp.eq.s32.totalorder %s19, 0
      %p124 = por %p122, %p123
      %p125 = scmp.ne.s32.totalorder %s113, %s114
      %p126 = scmp.eq.s32.totalorder %s20, 1
      %p127 = por %p125, %p126
      %p129 = scmp.ne.s32.totalorder %s114, %s128
      %p130 = scmp.eq.s32.totalorder %s20, 0
      %p131 = por %p129, %p130
      %s133 = sadd.s32 %s132, 1
      %p136 = scmp.eq.s32.totalorder %s14, 1
      %p137 = scmp.ne.s32.totalorder %s132, %s134
      %p138 = scmp.eq.s32.totalorder %s14, 0
      %p139 = por %p137, %p138
      %p140 = scmp.ne.s32.totalorder %s132, %s134
      %p141 = scmp.eq.s32.totalorder %s19, 1
      %p142 = por %p140, %p141
      %p143 = scmp.ne.s32.totalorder %s134, %s135
      %p144 = scmp.eq.s32.totalorder %s19, 0
      %p145 = por %p143, %p144
      %p146 = scmp.ne.s32.totalorder %s134, %s135
      %p147 = scmp.eq.s32.totalorder %s20, 1
      %p148 = por %p146, %p147
      %p150 = scmp.ne.s32.totalorder %s135, %s149
      %p151 = scmp.eq.s32.totalorder %s20, 0
      %p152 = por %p150, %p151
      %s154 = sadd.s32 %s153, 1
      %p157 = scmp.eq.s32.totalorder %s14, 1
      %p158 = scmp.ne.s32.totalorder %s153, %s155
      %p159 = scmp.eq.s32.totalorder %s14, 0
      %p160 = por %p158, %p159
      %p161 = scmp.ne.s32.totalorder %s153, %s155
      %p162 = scmp.eq.s32.totalorder %s19, 1
      %p163 = por %p161, %p162
      %p164 = scmp.ne.s32.totalorder %s155, %s156
      %p165 = scmp.eq.s32.totalorder %s19, 0
      %p166 = por %p164, %p165
      %p167 = scmp.ne.s32.totalorder %s155, %s156
      %p168 = scmp.eq.s32.totalorder %s20, 1
      %p169 = por %p167, %p168
      %p171 = scmp.ne.s32.totalorder %s156, %s170
      %p172 = scmp.eq.s32.totalorder %s20, 0
      %p173 = por %p171, %p172
      %s174 = ssub.s32 %s14, %s21
      %p175 = scmp.eq.s32.totalorder %s174, 0
      %s177 = sadd.s32 %s176, 1
      %s178 = scalar_select %p175, %s176, %s177
      %p181 = pneg %p175
      %p182 = scmp.eq.s32.totalorder %s14, 1
      %p183 = por %p181, %p182
      %p184 = scmp.ne.s32.totalorder %s176, %s179
      %p185 = scmp.eq.s32.totalorder %s14, 0
      %p186 = por %p184, %p185
      %p187 = scmp.ne.s32.totalorder %s176, %s179
      %p188 = scmp.eq.s32.totalorder %s19, 1
      %p189 = por %p187, %p188
      %p190 = scmp.ne.s32.totalorder %s179, %s180
      %p191 = scmp.eq.s32.totalorder %s19, 0
      %p192 = por %p190, %p191
      %p193 = scmp.ne.s32.totalorder %s179, %s180
      %p194 = scmp.eq.s32.totalorder %s20, 1
      %p195 = por %p193, %p194
      %p197 = scmp.ne.s32.totalorder %s180, %s196
      %p198 = scmp.eq.s32.totalorder %s20, 0
      %p199 = por %p197, %p198
      %p200 = scmp.le.s32.totalorder 1, %s14
      %p201 = scmp.lt.s32.totalorder %s14, 3
      %p202 = pnand %p200, %p201
      %p203 = pneg %p202
      // Predicated region
      $region9: #{_lambda_.1} parent=5 // pred_check
        _
      $region10: #{_lambda_.1} parent=5 // pred_check_branch
        %205 = sbr.rel (%p202) target = $region12
      $region11: #{_lambda_.1} parent=5 // pred_region
        %s206 = ssub.s32 %s14, 1
        // Predicated region
        $region13: #{_lambda_.1} parent=11 // pred_check
          %p207 = pneg %p61
        $region14: #{_lambda_.1} parent=11 // pred_check_branch
          %209 = sbr.rel (%p207) target = $region16
        $region15: #{_lambda_.1} parent=11 // pred_region
          _
        $region16: #{_lambda_.1} parent=11 // pred_fallthru
          _
        // Predicated region
        $region17: #{_lambda_.1} parent=11 // pred_check
          %p210 = pneg %p82
        $region18: #{_lambda_.1} parent=11 // pred_check_branch
          %212 = sbr.rel (%p210) target = $region20
        $region19: #{_lambda_.1} parent=11 // pred_region
          _
        $region20: #{_lambda_.1} parent=11 // pred_fallthru
          _
        // Predicated region
        $region21: #{_lambda_.1} parent=11 // pred_check
          %p213 = pneg %p103
        $region22: #{_lambda_.1} parent=11 // pred_check_branch
          %215 = sbr.rel (%p213) target = $region24
        $region23: #{_lambda_.1} parent=11 // pred_region
          _
        $region24: #{_lambda_.1} parent=11 // pred_fallthru
          _
        // Predicated region
        $region25: #{_lambda_.1} parent=11 // pred_check
          %p216 = pneg %p124
        $region26: #{_lambda_.1} parent=11 // pred_check_branch
          %218 = sbr.rel (%p216) target = $region28
        $region27: #{_lambda_.1} parent=11 // pred_region
          _
        $region28: #{_lambda_.1} parent=11 // pred_fallthru
          _
        // Predicated region
        $region29: #{_lambda_.1} parent=11 // pred_check
          %p219 = pneg %p145
        $region30: #{_lambda_.1} parent=11 // pred_check_branch
          %221 = sbr.rel (%p219) target = $region32
        $region31: #{_lambda_.1} parent=11 // pred_region
          _
        $region32: #{_lambda_.1} parent=11 // pred_fallthru
          _
        // Predicated region
        $region33: #{_lambda_.1} parent=11 // pred_check
          %p222 = pneg %p166
        $region34: #{_lambda_.1} parent=11 // pred_check_branch
          %224 = sbr.rel (%p222) target = $region36
        $region35: #{_lambda_.1} parent=11 // pred_region
          _
        $region36: #{_lambda_.1} parent=11 // pred_fallthru
          _
      $region12: #{_lambda_.1} parent=5 // pred_fallthru
        _
      %p225 = scmp.lt.s32.totalorder %s14, 2
      // Predicated region
      $region37: #{_lambda_.1} parent=5 // pred_check
        %p226 = pneg %p225
      $region38: #{_lambda_.1} parent=5 // pred_check_branch
        %228 = sbr.rel (%p226) target = $region40
      $region39: #{_lambda_.1} parent=5 // pred_region
        // Predicated region
        $region41: #{_lambda_.1} parent=39 // pred_check
          %p229 = pneg %p34
        $region42: #{_lambda_.1} parent=39 // pred_check_branch
          %231 = sbr.rel (%p229) target = $region44
        $region43: #{_lambda_.1} parent=39 // pred_region
          %s232 = smul.u32 32, %s14
          %s233 = ssub.s32 38, %s232
          %p234 = scmp.lt.s32.totalorder %s233, 32
          %s235 = scalar_select %p234, %s233, 32
          %s236 = smul.u32 128, %s235
          %p237 = scmp.lt.s32.totalorder %s232, 37
          %s238 = scalar_select %p237, %s232, 37
          %s239 = smul.addr %s238, 8
          %s240 = scalar_lea.vmem %s0, %s239
          %s241 = smul.u32 32, %s14
          %s242 = ssub.s32 38, %s241
          %p243 = scmp.lt.s32.totalorder %s242, 32
          %s244 = scalar_select %p243, %s242, 32
          %s245 = smul.u32 128, %s244
        $region44: #{_lambda_.1} parent=39 // pred_fallthru
          _
      $region40: #{_lambda_.1} parent=5 // pred_fallthru
        _
      %p246 = scmp.le.s32.totalorder 1, %s14
      %p247 = scmp.lt.s32.totalorder %s14, 3
      %p248 = pnand %p246, %p247
      %p249 = pneg %p248
      // Predicated region
      $region45: #{_lambda_.1} parent=5 // pred_check
        _
      $region46: #{_lambda_.1} parent=5 // pred_check_branch
        %251 = sbr.rel (%p248) target = $region48
      $region47: #{_lambda_.1} parent=5 // pred_region
        %s252 = ssub.s32 %s14, 1
        %s253 = smul.u32 32, %s19
        %s254 = ssub.s32 38, %s253
        %p255 = scmp.lt.s32.totalorder %s254, 32
        %s256 = scalar_select %p255, %s254, 32
        %s257 = smul.u32 128, %s256
        %p258 = scmp.lt.s32.totalorder %s253, 37
        %s259 = scalar_select %p258, %s253, 37
        %s260 = smul.addr %s259, 8
        %s261 = scalar_lea.vmem %s0, %s260
        %p262 = pneg %p40
        %p263 = pneg %p37
        %p264 = pneg %p61
        %p265 = pneg %p58
        %p266 = pneg %p82
        %p267 = pneg %p79
        %p268 = pneg %p103
        %p269 = pneg %p100
        %p270 = pneg %p124
        %p271 = pneg %p121
        %p272 = pneg %p145
        %p273 = pneg %p142
        %p274 = pneg %p166
        %p275 = pneg %p163
        %p276 = pneg %p192
        %p277 = pneg %p189
        %s278 = sand.u32 %s179, 1
        %s279 = sand.u32 %s179, 1
        %s280 = smul.addr %s279, 256
        %s281 = scalar_lea.vmem [#allocation3], %s280
        %s282 = smul.u32 32, %s19
        %s283 = ssub.s32 38, %s282
        %p284 = scmp.lt.s32.totalorder %s283, 32
        %s285 = scalar_select %p284, %s283, 32
        %s286 = smul.u32 128, %s285
        %p287 = scmp.lt.s32.totalorder %s282, 37
        %s288 = scalar_select %p287, %s282, 37
        %s289 = smul.addr %s288, 8
        %s290 = scalar_lea.vmem %s0, %s289
        %s291 = smul.u32 32, %s19
        %s292 = ssub.s32 38, %s291
        %p293 = scmp.lt.s32.totalorder %s292, 32
        %s294 = scalar_select %p293, %s292, 32
        %s295 = smul.u32 128, %s294
        %s296 = smul.u32 32, %s19
        %s297 = ssub.s32 38, %s296
        %p298 = scmp.lt.s32.totalorder %s297, 32
        %s299 = scalar_select %p298, %s297, 32
        %s300 = smul.u32 128, %s299
        %v301 = vld [vmem:[%s290] sm:$0xff]
        %v302 = vld [vmem:[%s290 + $0x8] sm:$0xff]
        %v303 = vld [vmem:[%s290 + $0x10] sm:$0xff]
        %v304 = vld [vmem:[%s290 + $0x18] sm:$0xff]
        %v305 = vld [vmem:[%s290 + $0x20] sm:$0xff]
        %v306 = vld [vmem:[%s290 + $0x28] sm:$0xff]
        %v307 = vld [vmem:[%s290 + $0x30] sm:$0xff]
        %v308 = vld [vmem:[%s290 + $0x38] sm:$0xff]
        %v309 = vld [vmem:[%s290 + $0x40] sm:$0xff]
        %v310 = vld [vmem:[%s290 + $0x48] sm:$0xff]
        %v311 = vld [vmem:[%s290 + $0x50] sm:$0xff]
        %v312 = vld [vmem:[%s290 + $0x58] sm:$0xff]
        %v313 = vld [vmem:[%s290 + $0x60] sm:$0xff]
        %v314 = vld [vmem:[%s290 + $0x68] sm:$0xff]
        %v315 = vld [vmem:[%s290 + $0x70] sm:$0xff]
        %v316 = vld [vmem:[%s290 + $0x78] sm:$0xff]
        %v317 = vld [vmem:[%s290 + $0x80] sm:$0xff]
        %v318 = vld [vmem:[%s290 + $0x88] sm:$0xff]
        %v319 = vld [vmem:[%s290 + $0x90] sm:$0xff]
        %v320 = vld [vmem:[%s290 + $0x98] sm:$0xff]
        %v321 = vld [vmem:[%s290 + $0xa0] sm:$0xff]
        %v322 = vld [vmem:[%s290 + $0xa8] sm:$0xff]
        %v323 = vld [vmem:[%s290 + $0xb0] sm:$0xff]
        %v324 = vld [vmem:[%s290 + $0xb8] sm:$0xff]
        %v325 = vld [vmem:[%s290 + $0xc0] sm:$0xff]
        %v326 = vld [vmem:[%s290 + $0xc8] sm:$0xff]
        %v327 = vld [vmem:[%s290 + $0xd0] sm:$0xff]
        %v328 = vld [vmem:[%s290 + $0xd8] sm:$0xff]
        %v329 = vld [vmem:[%s290 + $0xe0] sm:$0xff]
        %v330 = vld [vmem:[%s290 + $0xe8] sm:$0xff]
        %v331 = vld [vmem:[%s290 + $0xf0] sm:$0xff]
        %v332 = vld [vmem:[%s290 + $0xf8] sm:$0xff]
        %v333 = vld [vmem:[%s1] sm:$0xff]
        %v334 = vld [vmem:[%s1 + $0x8] sm:$0xff]
        %v335 = vld [vmem:[%s1 + $0x10] sm:$0xff]
        %v336 = vld [vmem:[%s1 + $0x18] sm:$0xff]
        %v337 = vld [vmem:[%s2] sm:$0x1]
        %v339 = vlaneseq
        %v340 = vshrl.u32 %v339, 7
        %v341 = vsub.s32 0, %v340
        %v342 = vrot.slane %v337, %v341
        %vm344 = vcmask 261120
        %v346 = vsel %vm344, %v301, 0
        %v349 = vsel %vm344, %v302, 0
        %v352 = vsel %vm344, %v303, 0
        %v355 = vsel %vm344, %v304, 0
        %v358 = vsel %vm344, %v305, 0
        %v361 = vsel %vm344, %v306, 0
        %v364 = vsel %vm344, %v307, 0
        %v367 = vsel %vm344, %v308, 0
        %v370 = vsel %vm344, %v309, 0
        %v373 = vsel %vm344, %v310, 0
        %v376 = vsel %vm344, %v311, 0
        %v379 = vsel %vm344, %v312, 0
        %v382 = vsel %vm344, %v313, 0
        %v385 = vsel %vm344, %v314, 0
        %v388 = vsel %vm344, %v315, 0
        %v391 = vsel %vm344, %v316, 0
        %v394 = vsel %vm344, %v317, 0
        %v397 = vsel %vm344, %v318, 0
        %v400 = vsel %vm344, %v319, 0
        %v403 = vsel %vm344, %v320, 0
        %v406 = vsel %vm344, %v321, 0
        %v409 = vsel %vm344, %v322, 0
        %v412 = vsel %vm344, %v323, 0
        %v415 = vsel %vm344, %v324, 0
        %v418 = vsel %vm344, %v325, 0
        %v421 = vsel %vm344, %v326, 0
        %v424 = vsel %vm344, %v327, 0
        %v427 = vsel %vm344, %v328, 0
        %v430 = vsel %vm344, %v329, 0
        %v433 = vsel %vm344, %v330, 0
        %v436 = vsel %vm344, %v331, 0
        %v439 = vsel %vm344, %v332, 0
        %441 = vmatprep.subr.mxu0 0.0
        %442 = vmatpush1.msra.mxu0 %v333
        %443 = vmatprep.subr.mxu0 0.0
        %444 = vmatpush1.msra.mxu0 %v334
        %445 = vmatprep.subr.mxu0 0.0
        %446 = vmatpush1.msra.mxu0 %v335
        %447 = vmatprep.subr.mxu0 0.0
        %448 = vmatpush1.msra.mxu0 %v336
        %449 = vmatprep.subr.mxu0 0.0
        %450 = vmatpush1.msra.mxu0 0.0
        %451 = vmatprep.subr.mxu0 0.0
        %452 = vmatpush1.msra.mxu0 0.0
        %453 = vmatprep.subr.mxu0 0.0
        %454 = vmatpush1.msra.mxu0 0.0
        %455 = vmatprep.subr.mxu0 0.0
        %456 = vmatpush1.msra.mxu0 0.0
        %457 = vmatprep.subr.mxu0 0.0
        %458 = vmatpush1.msra.mxu0 0.0
        %459 = vmatprep.subr.mxu0 0.0
        %460 = vmatpush1.msra.mxu0 0.0
        %461 = vmatprep.subr.mxu0 0.0
        %462 = vmatpush1.msra.mxu0 0.0
        %463 = vmatprep.subr.mxu0 0.0
        %464 = vmatpush1.msra.mxu0 0.0
        %465 = vmatprep.subr.mxu0 0.0
        %466 = vmatpush1.msra.mxu0 0.0
        %467 = vmatprep.subr.mxu0 0.0
        %468 = vmatpush1.msra.mxu0 0.0
        %469 = vmatprep.subr.mxu0 0.0
        %470 = vmatpush1.msra.mxu0 0.0
        %471 = vmatprep.subr.mxu0 0.0
        %472 = vmatpush1.msra.mxu0 0.0
        %473 = vmatprep.subr.mxu0 0.0
        %474 = vmatpush1.msra.mxu0 0.0
        %475 = vmatprep.subr.mxu0 0.0
        %476 = vmatpush1.msra.mxu0 0.0
        %477 = vmatprep.subr.mxu0 0.0
        %478 = vmatpush1.msra.mxu0 0.0
        %479 = vmatprep.subr.mxu0 0.0
        %480 = vmatpush1.msra.mxu0 0.0
        %481 = vmatprep.subr.mxu0 0.0
        %482 = vmatpush1.msra.mxu0 0.0
        %483 = vmatprep.subr.mxu0 0.0
        %484 = vmatpush1.msra.mxu0 0.0
        %485 = vmatprep.subr.mxu0 0.0
        %486 = vmatpush1.msra.mxu0 0.0
        %487 = vmatprep.subr.mxu0 0.0
        %488 = vmatpush1.msra.mxu0 0.0
        %489 = vmatprep.subr.mxu0 0.0
        %490 = vmatpush1.msra.mxu0 0.0
        %491 = vmatprep.subr.mxu0 0.0
        %492 = vmatpush1.msra.mxu0 0.0
        %493 = vmatprep.subr.mxu0 0.0
        %494 = vmatpush1.msra.mxu0 0.0
        %495 = vmatprep.subr.mxu0 0.0
        %496 = vmatpush1.msra.mxu0 0.0
        %497 = vmatprep.subr.mxu0 0.0
        %498 = vmatpush1.msra.mxu0 0.0
        %499 = vmatprep.subr.mxu0 0.0
        %500 = vmatpush1.msra.mxu0 0.0
        %501 = vmatprep.subr.mxu0 0.0
        %502 = vmatpush1.msra.mxu0 0.0
        %503 = vmatprep.subr.mxu0 0.0
        %504 = vmatpush1.msra.mxu0 0.0
        %505 = vmatprep.mubr.f32.mxu0 0.0
        %506 = vmatmul.mubr.f32.gmra.mrb[0].mxu0 %v346
        %v507 = vpop.f32.mrb[0].mxu0
        %v508 = vadd.f32 %v342, %v507
        %v509 = vpop.f32.mrb[0].mxu0
        %510 = vmatprep.mubr.f32.mxu0 0.0
        %511 = vmatmul.mubr.f32.gmra.mrb[0].mxu0 %v349
        %v512 = vpop.f32.mrb[0].mxu0
        %v513 = vadd.f32 %v342, %v512
        %v514 = vpop.f32.mrb[0].mxu0
        %515 = vmatprep.mubr.f32.mxu0 0.0
        %516 = vmatmul.mubr.f32.gmra.mrb[0].mxu0 %v352
        %v517 = vpop.f32.mrb[0].mxu0
        %v518 = vadd.f32 %v342, %v517
        %v519 = vpop.f32.mrb[0].mxu0
        %520 = vmatprep.mubr.f32.mxu0 0.0
        %521 = vmatmul.mubr.f32.gmra.mrb[0].mxu0 %v355
        %v522 = vpop.f32.mrb[0].mxu0
        %v523 = vadd.f32 %v342, %v522
        %v524 = vpop.f32.mrb[0].mxu0
        %525 = vmatprep.mubr.f32.mxu0 0.0
        %526 = vmatmul.mubr.f32.gmra.mrb[0].mxu0 %v358
        %v527 = vpop.f32.mrb[0].mxu0
        %v528 = vadd.f32 %v342, %v527
        %v529 = vpop.f32.mrb[0].mxu0
        %530 = vmatprep.mubr.f32.mxu0 0.0
        %531 = vmatmul.mubr.f32.gmra.mrb[0].mxu0 %v361
        %v532 = vpop.f32.mrb[0].mxu0
        %v533 = vadd.f32 %v342, %v532
        %v534 = vpop.f32.mrb[0].mxu0
        %535 = vmatprep.mubr.f32.mxu0 0.0
        %536 = vmatmul.mubr.f32.gmra.mrb[0].mxu0 %v364
        %v537 = vpop.f32.mrb[0].mxu0
        %v538 = vadd.f32 %v342, %v537
        %v539 = vpop.f32.mrb[0].mxu0
        %540 = vmatprep.mubr.f32.mxu0 0.0
        %541 = vmatmul.mubr.f32.gmra.mrb[0].mxu0 %v367
        %v542 = vpop.f32.mrb[0].mxu0
        %v543 = vadd.f32 %v342, %v542
        %v544 = vpop.f32.mrb[0].mxu0
        %545 = vmatprep.mubr.f32.mxu0 0.0
        %546 = vmatmul.mubr.f32.gmra.mrb[0].mxu0 %v370
        %v547 = vpop.f32.mrb[0].mxu0
        %v548 = vadd.f32 %v342, %v547
        %v549 = vpop.f32.mrb[0].mxu0
        %550 = vmatprep.mubr.f32.mxu0 0.0
        %551 = vmatmul.mubr.f32.gmra.mrb[0].mxu0 %v373
        %v552 = vpop.f32.mrb[0].mxu0
        %v553 = vadd.f32 %v342, %v552
        %v554 = vpop.f32.mrb[0].mxu0
        %555 = vmatprep.mubr.f32.mxu0 0.0
        %556 = vmatmul.mubr.f32.gmra.mrb[0].mxu0 %v376
        %v557 = vpop.f32.mrb[0].mxu0
        %v558 = vadd.f32 %v342, %v557
        %v559 = vpop.f32.mrb[0].mxu0
        %560 = vmatprep.mubr.f32.mxu0 0.0
        %561 = vmatmul.mubr.f32.gmra.mrb[0].mxu0 %v379
        %v562 = vpop.f32.mrb[0].mxu0
        %v563 = vadd.f32 %v342, %v562
        %v564 = vpop.f32.mrb[0].mxu0
        %565 = vmatprep.mubr.f32.mxu0 0.0
        %566 = vmatmul.mubr.f32.gmra.mrb[0].mxu0 %v382
        %v567 = vpop.f32.mrb[0].mxu0
        %v568 = vadd.f32 %v342, %v567
        %v569 = vpop.f32.mrb[0].mxu0
        %570 = vmatprep.mubr.f32.mxu0 0.0
        %571 = vmatmul.mubr.f32.gmra.mrb[0].mxu0 %v385
        %v572 = vpop.f32.mrb[0].mxu0
        %v573 = vadd.f32 %v342, %v572
        %v574 = vpop.f32.mrb[0].mxu0
        %575 = vmatprep.mubr.f32.mxu0 0.0
        %576 = vmatmul.mubr.f32.gmra.mrb[0].mxu0 %v388
        %v577 = vpop.f32.mrb[0].mxu0
        %v578 = vadd.f32 %v342, %v577
        %v579 = vpop.f32.mrb[0].mxu0
        %580 = vmatprep.mubr.f32.mxu0 0.0
        %581 = vmatmul.mubr.f32.gmra.mrb[0].mxu0 %v391
        %v582 = vpop.f32.mrb[0].mxu0
        %v583 = vadd.f32 %v342, %v582
        %v584 = vpop.f32.mrb[0].mxu0
        %585 = vmatprep.mubr.f32.mxu0 0.0
        %586 = vmatmul.mubr.f32.gmra.mrb[0].mxu0 %v394
        %v587 = vpop.f32.mrb[0].mxu0
        %v588 = vadd.f32 %v342, %v587
        %v589 = vpop.f32.mrb[0].mxu0
        %590 = vmatprep.mubr.f32.mxu0 0.0
        %591 = vmatmul.mubr.f32.gmra.mrb[0].mxu0 %v397
        %v592 = vpop.f32.mrb[0].mxu0
        %v593 = vadd.f32 %v342, %v592
        %v594 = vpop.f32.mrb[0].mxu0
        %595 = vmatprep.mubr.f32.mxu0 0.0
        %596 = vmatmul.mubr.f32.gmra.mrb[0].mxu0 %v400
        %v597 = vpop.f32.mrb[0].mxu0
        %v598 = vadd.f32 %v342, %v597
        %v599 = vpop.f32.mrb[0].mxu0
        %600 = vmatprep.mubr.f32.mxu0 0.0
        %601 = vmatmul.mubr.f32.gmra.mrb[0].mxu0 %v403
        %v602 = vpop.f32.mrb[0].mxu0
        %v603 = vadd.f32 %v342, %v602
        %v604 = vpop.f32.mrb[0].mxu0
        %605 = vmatprep.mubr.f32.mxu0 0.0
        %606 = vmatmul.mubr.f32.gmra.mrb[0].mxu0 %v406
        %v607 = vpop.f32.mrb[0].mxu0
        %v608 = vadd.f32 %v342, %v607
        %v609 = vpop.f32.mrb[0].mxu0
        %610 = vmatprep.mubr.f32.mxu0 0.0
        %611 = vmatmul.mubr.f32.gmra.mrb[0].mxu0 %v409
        %v612 = vpop.f32.mrb[0].mxu0
        %v613 = vadd.f32 %v342, %v612
        %v614 = vpop.f32.mrb[0].mxu0
        %615 = vmatprep.mubr.f32.mxu0 0.0
        %616 = vmatmul.mubr.f32.gmra.mrb[0].mxu0 %v412
        %v617 = vpop.f32.mrb[0].mxu0
        %v618 = vadd.f32 %v342, %v617
        %v619 = vpop.f32.mrb[0].mxu0
        %620 = vmatprep.mubr.f32.mxu0 0.0
        %621 = vmatmul.mubr.f32.gmra.mrb[0].mxu0 %v415
        %v622 = vpop.f32.mrb[0].mxu0
        %v623 = vadd.f32 %v342, %v622
        %v624 = vpop.f32.mrb[0].mxu0
        %625 = vmatprep.mubr.f32.mxu0 0.0
        %626 = vmatmul.mubr.f32.gmra.mrb[0].mxu0 %v418
        %v627 = vpop.f32.mrb[0].mxu0
        %v628 = vadd.f32 %v342, %v627
        %v629 = vpop.f32.mrb[0].mxu0
        %630 = vmatprep.mubr.f32.mxu0 0.0
        %631 = vmatmul.mubr.f32.gmra.mrb[0].mxu0 %v421
        %v632 = vpop.f32.mrb[0].mxu0
        %v633 = vadd.f32 %v342, %v632
        %v634 = vpop.f32.mrb[0].mxu0
        %635 = vmatprep.mubr.f32.mxu0 0.0
        %636 = vmatmul.mubr.f32.gmra.mrb[0].mxu0 %v424
        %v637 = vpop.f32.mrb[0].mxu0
        %v638 = vadd.f32 %v342, %v637
        %v639 = vpop.f32.mrb[0].mxu0
        %640 = vmatprep.mubr.f32.mxu0 0.0
        %641 = vmatmul.mubr.f32.gmra.mrb[0].mxu0 %v427
        %v642 = vpop.f32.mrb[0].mxu0
        %v643 = vadd.f32 %v342, %v642
        %v644 = vpop.f32.mrb[0].mxu0
        %645 = vmatprep.mubr.f32.mxu0 0.0
        %646 = vmatmul.mubr.f32.gmra.mrb[0].mxu0 %v430
        %v647 = vpop.f32.mrb[0].mxu0
        %v648 = vadd.f32 %v342, %v647
        %v649 = vpop.f32.mrb[0].mxu0
        %650 = vmatprep.mubr.f32.mxu0 0.0
        %651 = vmatmul.mubr.f32.gmra.mrb[0].mxu0 %v433
        %v652 = vpop.f32.mrb[0].mxu0
        %v653 = vadd.f32 %v342, %v652
        %v654 = vpop.f32.mrb[0].mxu0
        %655 = vmatprep.mubr.f32.mxu0 0.0
        %656 = vmatmul.mubr.f32.gmra.mrb[0].mxu0 %v436
        %v657 = vpop.f32.mrb[0].mxu0
        %v658 = vadd.f32 %v342, %v657
        %v659 = vpop.f32.mrb[0].mxu0
        %660 = vmatprep.mubr.f32.mxu0 0.0
        %661 = vmatmul.mubr.f32.gmra.mrb[0].mxu0 %v439
        %v662 = vpop.f32.mrb[0].mxu0
        %v663 = vadd.f32 %v342, %v662
        %v664 = vpop.f32.mrb[0].mxu0
        %665 = vdwg.mxu0
        %v666 = vmax.f32 %v508, 0.0
        %v667 = vmax.f32 %v513, 0.0
        %v668 = vmax.f32 %v518, 0.0
        %v669 = vmax.f32 %v523, 0.0
        %v670 = vmax.f32 %v528, 0.0
        %v671 = vmax.f32 %v533, 0.0
        %v672 = vmax.f32 %v538, 0.0
        %v673 = vmax.f32 %v543, 0.0
        %v674 = vmax.f32 %v548, 0.0
        %v675 = vmax.f32 %v553, 0.0
        %v676 = vmax.f32 %v558, 0.0
        %v677 = vmax.f32 %v563, 0.0
        %v678 = vmax.f32 %v568, 0.0
        %v679 = vmax.f32 %v573, 0.0
        %v680 = vmax.f32 %v578, 0.0
        %v681 = vmax.f32 %v583, 0.0
        %v682 = vmax.f32 %v588, 0.0
        %v683 = vmax.f32 %v593, 0.0
        %v684 = vmax.f32 %v598, 0.0
        %v685 = vmax.f32 %v603, 0.0
        %v686 = vmax.f32 %v608, 0.0
        %v687 = vmax.f32 %v613, 0.0
        %v688 = vmax.f32 %v618, 0.0
        %v689 = vmax.f32 %v623, 0.0
        %v690 = vmax.f32 %v628, 0.0
        %v691 = vmax.f32 %v633, 0.0
        %v692 = vmax.f32 %v638, 0.0
        %v693 = vmax.f32 %v643, 0.0
        %v694 = vmax.f32 %v648, 0.0
        %v695 = vmax.f32 %v653, 0.0
        %v696 = vmax.f32 %v658, 0.0
        %v697 = vmax.f32 %v663, 0.0
        %v698 = vld [vmem:[%s3] sm:$0xff]
        %v699 = vld [vmem:[%s3 + $0x8] sm:$0xff]
        %v700 = vld [vmem:[%s3 + $0x10] sm:$0xff]
        %v701 = vld [vmem:[%s3 + $0x18] sm:$0xff]
        %v702 = vld [vmem:[%s3 + $0x20] sm:$0xff]
        %v703 = vld [vmem:[%s3 + $0x28] sm:$0xff]
        %v704 = vld [vmem:[%s3 + $0x30] sm:$0xff]
        %v705 = vld [vmem:[%s3 + $0x38] sm:$0xff]
        %v706 = vld [vmem:[%s4] sm:$0x1]
        %v708 = vlaneseq
        %v709 = vshrl.u32 %v708, 7
        %v710 = vsub.s32 0, %v709
        %v711 = vrot.slane %v706, %v710
        %vm713 = vcmask 523264
        %v715 = vsel %vm713, %v666, 0
        %v718 = vsel %vm713, %v667, 0
        %v721 = vsel %vm713, %v668, 0
        %v724 = vsel %vm713, %v669, 0
        %v727 = vsel %vm713, %v670, 0
        %v730 = vsel %vm713, %v671, 0
        %v733 = vsel %vm713, %v672, 0
        %v736 = vsel %vm713, %v673, 0
        %v739 = vsel %vm713, %v674, 0
        %v742 = vsel %vm713, %v675, 0
        %v745 = vsel %vm713, %v676, 0
        %v748 = vsel %vm713, %v677, 0
        %v751 = vsel %vm713, %v678, 0
        %v754 = vsel %vm713, %v679, 0
        %v757 = vsel %vm713, %v680, 0
        %v760 = vsel %vm713, %v681, 0
        %v763 = vsel %vm713, %v682, 0
        %v766 = vsel %vm713, %v683, 0
        %v769 = vsel %vm713, %v684, 0
        %v772 = vsel %vm713, %v685, 0
        %v775 = vsel %vm713, %v686, 0
        %v778 = vsel %vm713, %v687, 0
        %v781 = vsel %vm713, %v688, 0
        %v784 = vsel %vm713, %v689, 0
        %v787 = vsel %vm713, %v690, 0
        %v790 = vsel %vm713, %v691, 0
        %v793 = vsel %vm713, %v692, 0
        %v796 = vsel %vm713, %v693, 0
        %v799 = vsel %vm713, %v694, 0
        %v802 = vsel %vm713, %v695, 0
        %v805 = vsel %vm713, %v696, 0
        %v808 = vsel %vm713, %v697, 0
        %810 = vmatprep.subr.mxu0 0.0
        %811 = vmatpush1.msra.mxu0 %v698
        %812 = vmatprep.subr.mxu0 0.0
        %813 = vmatpush1.msra.mxu0 %v699
        %814 = vmatprep.subr.mxu0 0.0
        %815 = vmatpush1.msra.mxu0 %v700
        %816 = vmatprep.subr.mxu0 0.0
        %817 = vmatpush1.msra.mxu0 %v701
        %818 = vmatprep.subr.mxu0 0.0
        %819 = vmatpush1.msra.mxu0 %v702
        %820 = vmatprep.subr.mxu0 0.0
        %821 = vmatpush1.msra.mxu0 %v703
        %822 = vmatprep.subr.mxu0 0.0
        %823 = vmatpush1.msra.mxu0 %v704
        %824 = vmatprep.subr.mxu0 0.0
        %825 = vmatpush1.msra.mxu0 %v705
        %826 = vmatprep.subr.mxu0 0.0
        %827 = vmatpush1.msra.mxu0 0.0
        %828 = vmatprep.subr.mxu0 0.0
        %829 = vmatpush1.msra.mxu0 0.0
        %830 = vmatprep.subr.mxu0 0.0
        %831 = vmatpush1.msra.mxu0 0.0
        %832 = vmatprep.subr.mxu0 0.0
        %833 = vmatpush1.msra.mxu0 0.0
        %834 = vmatprep.subr.mxu0 0.0
        %835 = vmatpush1.msra.mxu0 0.0
        %836 = vmatprep.subr.mxu0 0.0
        %837 = vmatpush1.msra.mxu0 0.0
        %838 = vmatprep.subr.mxu0 0.0
        %839 = vmatpush1.msra.mxu0 0.0
        %840 = vmatprep.subr.mxu0 0.0
        %841 = vmatpush1.msra.mxu0 0.0
        %842 = vmatprep.subr.mxu0 0.0
        %843 = vmatpush1.msra.mxu0 0.0
        %844 = vmatprep.subr.mxu0 0.0
        %845 = vmatpush1.msra.mxu0 0.0
        %846 = vmatprep.subr.mxu0 0.0
        %847 = vmatpush1.msra.mxu0 0.0
        %848 = vmatprep.subr.mxu0 0.0
        %849 = vmatpush1.msra.mxu0 0.0
        %850 = vmatprep.subr.mxu0 0.0
        %851 = vmatpush1.msra.mxu0 0.0
        %852 = vmatprep.subr.mxu0 0.0
        %853 = vmatpush1.msra.mxu0 0.0
        %854 = vmatprep.subr.mxu0 0.0
        %855 = vmatpush1.msra.mxu0 0.0
        %856 = vmatprep.subr.mxu0 0.0
        %857 = vmatpush1.msra.mxu0 0.0
        %858 = vmatprep.subr.mxu0 0.0
        %859 = vmatpush1.msra.mxu0 0.0
        %860 = vmatprep.subr.mxu0 0.0
        %861 = vmatpush1.msra.mxu0 0.0
        %862 = vmatprep.subr.mxu0 0.0
        %863 = vmatpush1.msra.mxu0 0.0
        %864 = vmatprep.subr.mxu0 0.0
        %865 = vmatpush1.msra.mxu0 0.0
        %866 = vmatprep.subr.mxu0 0.0
        %867 = vmatpush1.msra.mxu0 0.0
        %868 = vmatprep.subr.mxu0 0.0
        %869 = vmatpush1.msra.mxu0 0.0
        %870 = vmatprep.subr.mxu0 0.0
        %871 = vmatpush1.msra.mxu0 0.0
        %872 = vmatprep.subr.mxu0 0.0
        %873 = vmatpush1.msra.mxu0 0.0
        %874 = vmatprep.mubr.f32.mxu0 0.0
        %875 = vmatmul.mubr.f32.gmra.mrb[0].mxu0 %v715
        %v876 = vpop.f32.mrb[0].mxu0
        %v877 = vadd.f32 %v711, %v876
        %v878 = vpop.f32.mrb[0].mxu0
        %879 = vmatprep.mubr.f32.mxu0 0.0
        %880 = vmatmul.mubr.f32.gmra.mrb[0].mxu0 %v718
        %v881 = vpop.f32.mrb[0].mxu0
        %v882 = vadd.f32 %v711, %v881
        %v883 = vpop.f32.mrb[0].mxu0
        %884 = vmatprep.mubr.f32.mxu0 0.0
        %885 = vmatmul.mubr.f32.gmra.mrb[0].mxu0 %v721
        %v886 = vpop.f32.mrb[0].mxu0
        %v887 = vadd.f32 %v711, %v886
        %v888 = vpop.f32.mrb[0].mxu0
        %889 = vmatprep.mubr.f32.mxu0 0.0
        %890 = vmatmul.mubr.f32.gmra.mrb[0].mxu0 %v724
        %v891 = vpop.f32.mrb[0].mxu0
        %v892 = vadd.f32 %v711, %v891
        %v893 = vpop.f32.mrb[0].mxu0
        %894 = vmatprep.mubr.f32.mxu0 0.0
        %895 = vmatmul.mubr.f32.gmra.mrb[0].mxu0 %v727
        %v896 = vpop.f32.mrb[0].mxu0
        %v897 = vadd.f32 %v711, %v896
        %v898 = vpop.f32.mrb[0].mxu0
        %899 = vmatprep.mubr.f32.mxu0 0.0
        %900 = vmatmul.mubr.f32.gmra.mrb[0].mxu0 %v730
        %v901 = vpop.f32.mrb[0].mxu0
        %v902 = vadd.f32 %v711, %v901
        %v903 = vpop.f32.mrb[0].mxu0
        %904 = vmatprep.mubr.f32.mxu0 0.0
        %905 = vmatmul.mubr.f32.gmra.mrb[0].mxu0 %v733
        %v906 = vpop.f32.mrb[0].mxu0
        %v907 = vadd.f32 %v711, %v906
        %v908 = vpop.f32.mrb[0].mxu0
        %909 = vmatprep.mubr.f32.mxu0 0.0
        %910 = vmatmul.mubr.f32.gmra.mrb[0].mxu0 %v736
        %v911 = vpop.f32.mrb[0].mxu0
        %v912 = vadd.f32 %v711, %v911
        %v913 = vpop.f32.mrb[0].mxu0
        %914 = vmatprep.mubr.f32.mxu0 0.0
        %915 = vmatmul.mubr.f32.gmra.mrb[0].mxu0 %v739
        %v916 = vpop.f32.mrb[0].mxu0
        %v917 = vadd.f32 %v711, %v916
        %v918 = vpop.f32.mrb[0].mxu0
        %919 = vmatprep.mubr.f32.mxu0 0.0
        %920 = vmatmul.mubr.f32.gmra.mrb[0].mxu0 %v742
        %v921 = vpop.f32.mrb[0].mxu0
        %v922 = vadd.f32 %v711, %v921
        %v923 = vpop.f32.mrb[0].mxu0
        %924 = vmatprep.mubr.f32.mxu0 0.0
        %925 = vmatmul.mubr.f32.gmra.mrb[0].mxu0 %v745
        %v926 = vpop.f32.mrb[0].mxu0
        %v927 = vadd.f32 %v711, %v926
        %v928 = vpop.f32.mrb[0].mxu0
        %929 = vmatprep.mubr.f32.mxu0 0.0
        %930 = vmatmul.mubr.f32.gmra.mrb[0].mxu0 %v748
        %v931 = vpop.f32.mrb[0].mxu0
        %v932 = vadd.f32 %v711, %v931
        %v933 = vpop.f32.mrb[0].mxu0
        %934 = vmatprep.mubr.f32.mxu0 0.0
        %935 = vmatmul.mubr.f32.gmra.mrb[0].mxu0 %v751
        %v936 = vpop.f32.mrb[0].mxu0
        %v937 = vadd.f32 %v711, %v936
        %v938 = vpop.f32.mrb[0].mxu0
        %939 = vmatprep.mubr.f32.mxu0 0.0
        %940 = vmatmul.mubr.f32.gmra.mrb[0].mxu0 %v754
        %v941 = vpop.f32.mrb[0].mxu0
        %v942 = vadd.f32 %v711, %v941
        %v943 = vpop.f32.mrb[0].mxu0
        %944 = vmatprep.mubr.f32.mxu0 0.0
        %945 = vmatmul.mubr.f32.gmra.mrb[0].mxu0 %v757
        %v946 = vpop.f32.mrb[0].mxu0
        %v947 = vadd.f32 %v711, %v946
        %v948 = vpop.f32.mrb[0].mxu0
        %949 = vmatprep.mubr.f32.mxu0 0.0
        %950 = vmatmul.mubr.f32.gmra.mrb[0].mxu0 %v760
        %v951 = vpop.f32.mrb[0].mxu0
        %v952 = vadd.f32 %v711, %v951
        %v953 = vpop.f32.mrb[0].mxu0
        %954 = vmatprep.mubr.f32.mxu0 0.0
        %955 = vmatmul.mubr.f32.gmra.mrb[0].mxu0 %v763
        %v956 = vpop.f32.mrb[0].mxu0
        %v957 = vadd.f32 %v711, %v956
        %v958 = vpop.f32.mrb[0].mxu0
        %959 = vmatprep.mubr.f32.mxu0 0.0
        %960 = vmatmul.mubr.f32.gmra.mrb[0].mxu0 %v766
        %v961 = vpop.f32.mrb[0].mxu0
        %v962 = vadd.f32 %v711, %v961
        %v963 = vpop.f32.mrb[0].mxu0
        %964 = vmatprep.mubr.f32.mxu0 0.0
        %965 = vmatmul.mubr.f32.gmra.mrb[0].mxu0 %v769
        %v966 = vpop.f32.mrb[0].mxu0
        %v967 = vadd.f32 %v711, %v966
        %v968 = vpop.f32.mrb[0].mxu0
        %969 = vmatprep.mubr.f32.mxu0 0.0
        %970 = vmatmul.mubr.f32.gmra.mrb[0].mxu0 %v772
        %v971 = vpop.f32.mrb[0].mxu0
        %v972 = vadd.f32 %v711, %v971
        %v973 = vpop.f32.mrb[0].mxu0
        %974 = vmatprep.mubr.f32.mxu0 0.0
        %975 = vmatmul.mubr.f32.gmra.mrb[0].mxu0 %v775
        %v976 = vpop.f32.mrb[0].mxu0
        %v977 = vadd.f32 %v711, %v976
        %v978 = vpop.f32.mrb[0].mxu0
        %979 = vmatprep.mubr.f32.mxu0 0.0
        %980 = vmatmul.mubr.f32.gmra.mrb[0].mxu0 %v778
        %v981 = vpop.f32.mrb[0].mxu0
        %v982 = vadd.f32 %v711, %v981
        %v983 = vpop.f32.mrb[0].mxu0
        %984 = vmatprep.mubr.f32.mxu0 0.0
        %985 = vmatmul.mubr.f32.gmra.mrb[0].mxu0 %v781
        %v986 = vpop.f32.mrb[0].mxu0
        %v987 = vadd.f32 %v711, %v986
        %v988 = vpop.f32.mrb[0].mxu0
        %989 = vmatprep.mubr.f32.mxu0 0.0
        %990 = vmatmul.mubr.f32.gmra.mrb[0].mxu0 %v784
        %v991 = vpop.f32.mrb[0].mxu0
        %v992 = vadd.f32 %v711, %v991
        %v993 = vpop.f32.mrb[0].mxu0
        %994 = vmatprep.mubr.f32.mxu0 0.0
        %995 = vmatmul.mubr.f32.gmra.mrb[0].mxu0 %v787
        %v996 = vpop.f32.mrb[0].mxu0
        %v997 = vadd.f32 %v711, %v996
        %v998 = vpop.f32.mrb[0].mxu0
        %999 = vmatprep.mubr.f32.mxu0 0.0
        %1000 = vmatmul.mubr.f32.gmra.mrb[0].mxu0 %v790
        %v1001 = vpop.f32.mrb[0].mxu0
        %v1002 = vadd.f32 %v711, %v1001
        %v1003 = vpop.f32.mrb[0].mxu0
        %1004 = vmatprep.mubr.f32.mxu0 0.0
        %1005 = vmatmul.mubr.f32.gmra.mrb[0].mxu0 %v793
        %v1006 = vpop.f32.mrb[0].mxu0
        %v1007 = vadd.f32 %v711, %v1006
        %v1008 = vpop.f32.mrb[0].mxu0
        %1009 = vmatprep.mubr.f32.mxu0 0.0
        %1010 = vmatmul.mubr.f32.gmra.mrb[0].mxu0 %v796
        %v1011 = vpop.f32.mrb[0].mxu0
        %v1012 = vadd.f32 %v711, %v1011
        %v1013 = vpop.f32.mrb[0].mxu0
        %1014 = vmatprep.mubr.f32.mxu0 0.0
        %1015 = vmatmul.mubr.f32.gmra.mrb[0].mxu0 %v799
        %v1016 = vpop.f32.mrb[0].mxu0
        %v1017 = vadd.f32 %v711, %v1016
        %v1018 = vpop.f32.mrb[0].mxu0
        %1019 = vmatprep.mubr.f32.mxu0 0.0
        %1020 = vmatmul.mubr.f32.gmra.mrb[0].mxu0 %v802
        %v1021 = vpop.f32.mrb[0].mxu0
        %v1022 = vadd.f32 %v711, %v1021
        %v1023 = vpop.f32.mrb[0].mxu0
        %1024 = vmatprep.mubr.f32.mxu0 0.0
        %1025 = vmatmul.mubr.f32.gmra.mrb[0].mxu0 %v805
        %v1026 = vpop.f32.mrb[0].mxu0
        %v1027 = vadd.f32 %v711, %v1026
        %v1028 = vpop.f32.mrb[0].mxu0
        %1029 = vmatprep.mubr.f32.mxu0 0.0
        %1030 = vmatmul.mubr.f32.gmra.mrb[0].mxu0 %v808
        %v1031 = vpop.f32.mrb[0].mxu0
        %v1032 = vadd.f32 %v711, %v1031
        %v1033 = vpop.f32.mrb[0].mxu0
        %1034 = vdwg.mxu0
        %v1035 = vmax.f32 %v877, 0.0
        %v1036 = vmax.f32 %v882, 0.0
        %v1037 = vmax.f32 %v887, 0.0
        %v1038 = vmax.f32 %v892, 0.0
        %v1039 = vmax.f32 %v897, 0.0
        %v1040 = vmax.f32 %v902, 0.0
        %v1041 = vmax.f32 %v907, 0.0
        %v1042 = vmax.f32 %v912, 0.0
        %v1043 = vmax.f32 %v917, 0.0
        %v1044 = vmax.f32 %v922, 0.0
        %v1045 = vmax.f32 %v927, 0.0
        %v1046 = vmax.f32 %v932, 0.0
        %v1047 = vmax.f32 %v937, 0.0
        %v1048 = vmax.f32 %v942, 0.0
        %v1049 = vmax.f32 %v947, 0.0
        %v1050 = vmax.f32 %v952, 0.0
        %v1051 = vmax.f32 %v957, 0.0
        %v1052 = vmax.f32 %v962, 0.0
        %v1053 = vmax.f32 %v967, 0.0
        %v1054 = vmax.f32 %v972, 0.0
        %v1055 = vmax.f32 %v977, 0.0
        %v1056 = vmax.f32 %v982, 0.0
        %v1057 = vmax.f32 %v987, 0.0
        %v1058 = vmax.f32 %v992, 0.0
        %v1059 = vmax.f32 %v997, 0.0
        %v1060 = vmax.f32 %v1002, 0.0
        %v1061 = vmax.f32 %v1007, 0.0
        %v1062 = vmax.f32 %v1012, 0.0
        %v1063 = vmax.f32 %v1017, 0.0
        %v1064 = vmax.f32 %v1022, 0.0
        %v1065 = vmax.f32 %v1027, 0.0
        %v1066 = vmax.f32 %v1032, 0.0
        %v1067 = vld [vmem:[%s5] sm:$0x1]
        %v1069 = vlaneseq
        %v1070 = vshrl.u32 %v1069, 7
        %v1071 = vsub.s32 0, %v1070
        %v1072 = vrot.slane %v1067, %v1071
        %v1074 = vmul.f32 %v1035, %v1072
        %v1075 = vmul.f32 %v1036, %v1072
        %v1076 = vmul.f32 %v1037, %v1072
        %v1077 = vmul.f32 %v1038, %v1072
        %v1078 = vmul.f32 %v1039, %v1072
        %v1079 = vmul.f32 %v1040, %v1072
        %v1080 = vmul.f32 %v1041, %v1072
        %v1081 = vmul.f32 %v1042, %v1072
        %v1082 = vmul.f32 %v1043, %v1072
        %v1083 = vmul.f32 %v1044, %v1072
        %v1084 = vmul.f32 %v1045, %v1072
        %v1085 = vmul.f32 %v1046, %v1072
        %v1086 = vmul.f32 %v1047, %v1072
        %v1087 = vmul.f32 %v1048, %v1072
        %v1088 = vmul.f32 %v1049, %v1072
        %v1089 = vmul.f32 %v1050, %v1072
        %v1090 = vmul.f32 %v1051, %v1072
        %v1091 = vmul.f32 %v1052, %v1072
        %v1092 = vmul.f32 %v1053, %v1072
        %v1093 = vmul.f32 %v1054, %v1072
        %v1094 = vmul.f32 %v1055, %v1072
        %v1095 = vmul.f32 %v1056, %v1072
        %v1096 = vmul.f32 %v1057, %v1072
        %v1097 = vmul.f32 %v1058, %v1072
        %v1098 = vmul.f32 %v1059, %v1072
        %v1099 = vmul.f32 %v1060, %v1072
        %v1100 = vmul.f32 %v1061, %v1072
        %v1101 = vmul.f32 %v1062, %v1072
        %v1102 = vmul.f32 %v1063, %v1072
        %v1103 = vmul.f32 %v1064, %v1072
        %v1104 = vmul.f32 %v1065, %v1072
        %v1105 = vmul.f32 %v1066, %v1072
        %v1106 = vsel %vm344, %v1074, 0.0
        %1107 = vadd.xlane.f32.xlu0 %v1106
        %v1108 = vpop.xlane.xlu0 %1107
        %v1109 = vsel %vm344, %v1075, 0.0
        %1110 = vadd.xlane.f32.xlu0 %v1109
        %v1111 = vpop.xlane.xlu0 %1110
        %v1112 = vsel %vm344, %v1076, 0.0
        %1113 = vadd.xlane.f32.xlu0 %v1112
        %v1114 = vpop.xlane.xlu0 %1113
        %v1115 = vsel %vm344, %v1077, 0.0
        %1116 = vadd.xlane.f32.xlu0 %v1115
        %v1117 = vpop.xlane.xlu0 %1116
        %v1118 = vsel %vm344, %v1078, 0.0
        %1119 = vadd.xlane.f32.xlu0 %v1118
        %v1120 = vpop.xlane.xlu0 %1119
        %v1121 = vsel %vm344, %v1079, 0.0
        %1122 = vadd.xlane.f32.xlu0 %v1121
        %v1123 = vpop.xlane.xlu0 %1122
        %v1124 = vsel %vm344, %v1080, 0.0
        %1125 = vadd.xlane.f32.xlu0 %v1124
        %v1126 = vpop.xlane.xlu0 %1125
        %v1127 = vsel %vm344, %v1081, 0.0
        %1128 = vadd.xlane.f32.xlu0 %v1127
        %v1129 = vpop.xlane.xlu0 %1128
        %v1130 = vsel %vm344, %v1082, 0.0
        %1131 = vadd.xlane.f32.xlu0 %v1130
        %v1132 = vpop.xlane.xlu0 %1131
        %v1133 = vsel %vm344, %v1083, 0.0
        %1134 = vadd.xlane.f32.xlu0 %v1133
        %v1135 = vpop.xlane.xlu0 %1134
        %v1136 = vsel %vm344, %v1084, 0.0
        %1137 = vadd.xlane.f32.xlu0 %v1136
        %v1138 = vpop.xlane.xlu0 %1137
        %v1139 = vsel %vm344, %v1085, 0.0
        %1140 = vadd.xlane.f32.xlu0 %v1139
        %v1141 = vpop.xlane.xlu0 %1140
        %v1142 = vsel %vm344, %v1086, 0.0
        %1143 = vadd.xlane.f32.xlu0 %v1142
        %v1144 = vpop.xlane.xlu0 %1143
        %v1145 = vsel %vm344, %v1087, 0.0
        %1146 = vadd.xlane.f32.xlu0 %v1145
        %v1147 = vpop.xlane.xlu0 %1146
        %v1148 = vsel %vm344, %v1088, 0.0
        %1149 = vadd.xlane.f32.xlu0 %v1148
        %v1150 = vpop.xlane.xlu0 %1149
        %v1151 = vsel %vm344, %v1089, 0.0
        %1152 = vadd.xlane.f32.xlu0 %v1151
        %v1153 = vpop.xlane.xlu0 %1152
        %v1154 = vsel %vm344, %v1090, 0.0
        %1155 = vadd.xlane.f32.xlu0 %v1154
        %v1156 = vpop.xlane.xlu0 %1155
        %v1157 = vsel %vm344, %v1091, 0.0
        %1158 = vadd.xlane.f32.xlu0 %v1157
        %v1159 = vpop.xlane.xlu0 %1158
        %v1160 = vsel %vm344, %v1092, 0.0
        %1161 = vadd.xlane.f32.xlu0 %v1160
        %v1162 = vpop.xlane.xlu0 %1161
        %v1163 = vsel %vm344, %v1093, 0.0
        %1164 = vadd.xlane.f32.xlu0 %v1163
        %v1165 = vpop.xlane.xlu0 %1164
        %v1166 = vsel %vm344, %v1094, 0.0
        %1167 = vadd.xlane.f32.xlu0 %v1166
        %v1168 = vpop.xlane.xlu0 %1167
        %v1169 = vsel %vm344, %v1095, 0.0
        %1170 = vadd.xlane.f32.xlu0 %v1169
        %v1171 = vpop.xlane.xlu0 %1170
        %v1172 = vsel %vm344, %v1096, 0.0
        %1173 = vadd.xlane.f32.xlu0 %v1172
        %v1174 = vpop.xlane.xlu0 %1173
        %v1175 = vsel %vm344, %v1097, 0.0
        %1176 = vadd.xlane.f32.xlu0 %v1175
        %v1177 = vpop.xlane.xlu0 %1176
        %v1178 = vsel %vm344, %v1098, 0.0
        %1179 = vadd.xlane.f32.xlu0 %v1178
        %v1180 = vpop.xlane.xlu0 %1179
        %v1181 = vsel %vm344, %v1099, 0.0
        %1182 = vadd.xlane.f32.xlu0 %v1181
        %v1183 = vpop.xlane.xlu0 %1182
        %v1184 = vsel %vm344, %v1100, 0.0
        %1185 = vadd.xlane.f32.xlu0 %v1184
        %v1186 = vpop.xlane.xlu0 %1185
        %v1187 = vsel %vm344, %v1101, 0.0
        %1188 = vadd.xlane.f32.xlu0 %v1187
        %v1189 = vpop.xlane.xlu0 %1188
        %v1190 = vsel %vm344, %v1102, 0.0
        %1191 = vadd.xlane.f32.xlu0 %v1190
        %v1192 = vpop.xlane.xlu0 %1191
        %v1193 = vsel %vm344, %v1103, 0.0
        %1194 = vadd.xlane.f32.xlu0 %v1193
        %v1195 = vpop.xlane.xlu0 %1194
        %v1196 = vsel %vm344, %v1104, 0.0
        %1197 = vadd.xlane.f32.xlu0 %v1196
        %v1198 = vpop.xlane.xlu0 %1197
        %v1199 = vsel %vm344, %v1105, 0.0
        %1200 = vadd.xlane.f32.xlu0 %v1199
        %v1201 = vpop.xlane.xlu0 %1200
        %s1202 = sld [smem:[#allocation2]]
        %v1203 = vstv %s1202
        %v1204 = vadd.f32 %v1108, %v1203
        %v1205 = vadd.f32 %v1111, %v1203
        %v1206 = vadd.f32 %v1114, %v1203
        %v1207 = vadd.f32 %v1117, %v1203
        %v1208 = vadd.f32 %v1120, %v1203
        %v1209 = vadd.f32 %v1123, %v1203
        %v1210 = vadd.f32 %v1126, %v1203
        %v1211 = vadd.f32 %v1129, %v1203
        %v1212 = vadd.f32 %v1132, %v1203
        %v1213 = vadd.f32 %v1135, %v1203
        %v1214 = vadd.f32 %v1138, %v1203
        %v1215 = vadd.f32 %v1141, %v1203
        %v1216 = vadd.f32 %v1144, %v1203
        %v1217 = vadd.f32 %v1147, %v1203
        %v1218 = vadd.f32 %v1150, %v1203
        %v1219 = vadd.f32 %v1153, %v1203
        %v1220 = vadd.f32 %v1156, %v1203
        %v1221 = vadd.f32 %v1159, %v1203
        %v1222 = vadd.f32 %v1162, %v1203
        %v1223 = vadd.f32 %v1165, %v1203
        %v1224 = vadd.f32 %v1168, %v1203
        %v1225 = vadd.f32 %v1171, %v1203
        %v1226 = vadd.f32 %v1174, %v1203
        %v1227 = vadd.f32 %v1177, %v1203
        %v1228 = vadd.f32 %v1180, %v1203
        %v1229 = vadd.f32 %v1183, %v1203
        %v1230 = vadd.f32 %v1186, %v1203
        %v1231 = vadd.f32 %v1189, %v1203
        %v1232 = vadd.f32 %v1192, %v1203
        %v1233 = vadd.f32 %v1195, %v1203
        %v1234 = vadd.f32 %v1198, %v1203
        %v1235 = vadd.f32 %v1201, %v1203
        %v1236 = vxor.u32 %v1204, 2147483648
        %v1237 = vxor.u32 %v1205, 2147483648
        %v1238 = vxor.u32 %v1206, 2147483648
        %v1239 = vxor.u32 %v1207, 2147483648
        %v1240 = vxor.u32 %v1208, 2147483648
        %v1241 = vxor.u32 %v1209, 2147483648
        %v1242 = vxor.u32 %v1210, 2147483648
        %v1243 = vxor.u32 %v1211, 2147483648
        %v1244 = vxor.u32 %v1212, 2147483648
        %v1245 = vxor.u32 %v1213, 2147483648
        %v1246 = vxor.u32 %v1214, 2147483648
        %v1247 = vxor.u32 %v1215, 2147483648
        %v1248 = vxor.u32 %v1216, 2147483648
        %v1249 = vxor.u32 %v1217, 2147483648
        %v1250 = vxor.u32 %v1218, 2147483648
        %v1251 = vxor.u32 %v1219, 2147483648
        %v1252 = vxor.u32 %v1220, 2147483648
        %v1253 = vxor.u32 %v1221, 2147483648
        %v1254 = vxor.u32 %v1222, 2147483648
        %v1255 = vxor.u32 %v1223, 2147483648
        %v1256 = vxor.u32 %v1224, 2147483648
        %v1257 = vxor.u32 %v1225, 2147483648
        %v1258 = vxor.u32 %v1226, 2147483648
        %v1259 = vxor.u32 %v1227, 2147483648
        %v1260 = vxor.u32 %v1228, 2147483648
        %v1261 = vxor.u32 %v1229, 2147483648
        %v1262 = vxor.u32 %v1230, 2147483648
        %v1263 = vxor.u32 %v1231, 2147483648
        %v1264 = vxor.u32 %v1232, 2147483648
        %v1265 = vxor.u32 %v1233, 2147483648
        %v1266 = vxor.u32 %v1234, 2147483648
        %v1267 = vxor.u32 %v1235, 2147483648
        %v1268 = vmul.f32 %v1236, 1.442695
        %v1269 = vpow.pop %v1268
        %v1270 = vmul.f32 %v1237, 1.442695
        %v1271 = vpow.pop %v1270
        %v1272 = vmul.f32 %v1238, 1.442695
        %v1273 = vpow.pop %v1272
        %v1274 = vmul.f32 %v1239, 1.442695
        %v1275 = vpow.pop %v1274
        %v1276 = vmul.f32 %v1240, 1.442695
        %v1277 = vpow.pop %v1276
        %v1278 = vmul.f32 %v1241, 1.442695
        %v1279 = vpow.pop %v1278
        %v1280 = vmul.f32 %v1242, 1.442695
        %v1281 = vpow.pop %v1280
        %v1282 = vmul.f32 %v1243, 1.442695
        %v1283 = vpow.pop %v1282
        %v1284 = vmul.f32 %v1244, 1.442695
        %v1285 = vpow.pop %v1284
        %v1286 = vmul.f32 %v1245, 1.442695
        %v1287 = vpow.pop %v1286
        %v1288 = vmul.f32 %v1246, 1.442695
        %v1289 = vpow.pop %v1288
        %v1290 = vmul.f32 %v1247, 1.442695
        %v1291 = vpow.pop %v1290
        %v1292 = vmul.f32 %v1248, 1.442695
        %v1293 = vpow.pop %v1292
        %v1294 = vmul.f32 %v1249, 1.442695
        %v1295 = vpow.pop %v1294
        %v1296 = vmul.f32 %v1250, 1.442695
        %v1297 = vpow.pop %v1296
        %v1298 = vmul.f32 %v1251, 1.442695
        %v1299 = vpow.pop %v1298
        %v1300 = vmul.f32 %v1252, 1.442695
        %v1301 = vpow.pop %v1300
        %v1302 = vmul.f32 %v1253, 1.442695
        %v1303 = vpow.pop %v1302
        %v1304 = vmul.f32 %v1254, 1.442695
        %v1305 = vpow.pop %v1304
        %v1306 = vmul.f32 %v1255, 1.442695
        %v1307 = vpow.pop %v1306
        %v1308 = vmul.f32 %v1256, 1.442695
        %v1309 = vpow.pop %v1308
        %v1310 = vmul.f32 %v1257, 1.442695
        %v1311 = vpow.pop %v1310
        %v1312 = vmul.f32 %v1258, 1.442695
        %v1313 = vpow.pop %v1312
        %v1314 = vmul.f32 %v1259, 1.442695
        %v1315 = vpow.pop %v1314
        %v1316 = vmul.f32 %v1260, 1.442695
        %v1317 = vpow.pop %v1316
        %v1318 = vmul.f32 %v1261, 1.442695
        %v1319 = vpow.pop %v1318
        %v1320 = vmul.f32 %v1262, 1.442695
        %v1321 = vpow.pop %v1320
        %v1322 = vmul.f32 %v1263, 1.442695
        %v1323 = vpow.pop %v1322
        %v1324 = vmul.f32 %v1264, 1.442695
        %v1325 = vpow.pop %v1324
        %v1326 = vmul.f32 %v1265, 1.442695
        %v1327 = vpow.pop %v1326
        %v1328 = vmul.f32 %v1266, 1.442695
        %v1329 = vpow.pop %v1328
        %v1330 = vmul.f32 %v1267, 1.442695
        %v1331 = vpow.pop %v1330
        %v1332 = vadd.f32 %v1269, 1.0
        %v1333 = vadd.f32 %v1271, 1.0
        %v1334 = vadd.f32 %v1273, 1.0
        %v1335 = vadd.f32 %v1275, 1.0
        %v1336 = vadd.f32 %v1277, 1.0
        %v1337 = vadd.f32 %v1279, 1.0
        %v1338 = vadd.f32 %v1281, 1.0
        %v1339 = vadd.f32 %v1283, 1.0
        %v1340 = vadd.f32 %v1285, 1.0
        %v1341 = vadd.f32 %v1287, 1.0
        %v1342 = vadd.f32 %v1289, 1.0
        %v1343 = vadd.f32 %v1291, 1.0
        %v1344 = vadd.f32 %v1293, 1.0
        %v1345 = vadd.f32 %v1295, 1.0
        %v1346 = vadd.f32 %v1297, 1.0
        %v1347 = vadd.f32 %v1299, 1.0
        %v1348 = vadd.f32 %v1301, 1.0
        %v1349 = vadd.f32 %v1303, 1.0
        %v1350 = vadd.f32 %v1305, 1.0
        %v1351 = vadd.f32 %v1307, 1.0
        %v1352 = vadd.f32 %v1309, 1.0
        %v1353 = vadd.f32 %v1311, 1.0
        %v1354 = vadd.f32 %v1313, 1.0
        %v1355 = vadd.f32 %v1315, 1.0
        %v1356 = vadd.f32 %v1317, 1.0
        %v1357 = vadd.f32 %v1319, 1.0
        %v1358 = vadd.f32 %v1321, 1.0
        %v1359 = vadd.f32 %v1323, 1.0
        %v1360 = vadd.f32 %v1325, 1.0
        %v1361 = vadd.f32 %v1327, 1.0
        %v1362 = vadd.f32 %v1329, 1.0
        %v1363 = vadd.f32 %v1331, 1.0
        %v1364 = vrcp.pop %v1332
        %v1365 = vmul.f32 1.0, %v1364
        %v1366 = vrcp.pop %v1333
        %v1367 = vmul.f32 1.0, %v1366
        %v1368 = vrcp.pop %v1334
        %v1369 = vmul.f32 1.0, %v1368
        %v1370 = vrcp.pop %v1335
        %v1371 = vmul.f32 1.0, %v1370
        %v1372 = vrcp.pop %v1336
        %v1373 = vmul.f32 1.0, %v1372
        %v1374 = vrcp.pop %v1337
        %v1375 = vmul.f32 1.0, %v1374
        %v1376 = vrcp.pop %v1338
        %v1377 = vmul.f32 1.0, %v1376
        %v1378 = vrcp.pop %v1339
        %v1379 = vmul.f32 1.0, %v1378
        %v1380 = vrcp.pop %v1340
        %v1381 = vmul.f32 1.0, %v1380
        %v1382 = vrcp.pop %v1341
        %v1383 = vmul.f32 1.0, %v1382
        %v1384 = vrcp.pop %v1342
        %v1385 = vmul.f32 1.0, %v1384
        %v1386 = vrcp.pop %v1343
        %v1387 = vmul.f32 1.0, %v1386
        %v1388 = vrcp.pop %v1344
        %v1389 = vmul.f32 1.0, %v1388
        %v1390 = vrcp.pop %v1345
        %v1391 = vmul.f32 1.0, %v1390
        %v1392 = vrcp.pop %v1346
        %v1393 = vmul.f32 1.0, %v1392
        %v1394 = vrcp.pop %v1347
        %v1395 = vmul.f32 1.0, %v1394
        %v1396 = vrcp.pop %v1348
        %v1397 = vmul.f32 1.0, %v1396
        %v1398 = vrcp.pop %v1349
        %v1399 = vmul.f32 1.0, %v1398
        %v1400 = vrcp.pop %v1350
        %v1401 = vmul.f32 1.0, %v1400
        %v1402 = vrcp.pop %v1351
        %v1403 = vmul.f32 1.0, %v1402
        %v1404 = vrcp.pop %v1352
        %v1405 = vmul.f32 1.0, %v1404
        %v1406 = vrcp.pop %v1353
        %v1407 = vmul.f32 1.0, %v1406
        %v1408 = vrcp.pop %v1354
        %v1409 = vmul.f32 1.0, %v1408
        %v1410 = vrcp.pop %v1355
        %v1411 = vmul.f32 1.0, %v1410
        %v1412 = vrcp.pop %v1356
        %v1413 = vmul.f32 1.0, %v1412
        %v1414 = vrcp.pop %v1357
        %v1415 = vmul.f32 1.0, %v1414
        %v1416 = vrcp.pop %v1358
        %v1417 = vmul.f32 1.0, %v1416
        %v1418 = vrcp.pop %v1359
        %v1419 = vmul.f32 1.0, %v1418
        %v1420 = vrcp.pop %v1360
        %v1421 = vmul.f32 1.0, %v1420
        %v1422 = vrcp.pop %v1361
        %v1423 = vmul.f32 1.0, %v1422
        %v1424 = vrcp.pop %v1362
        %v1425 = vmul.f32 1.0, %v1424
        %v1426 = vrcp.pop %v1363
        %v1427 = vmul.f32 1.0, %v1426
        %vm1428 = vcmask 7168
        %1429 = vst.msk [vmem:[%s281] sm:$0xff] %vm1428, %v1365
        %1430 = vst.msk [vmem:[%s281 + $0x8] sm:$0xff] %vm1428, %v1367
        %1431 = vst.msk [vmem:[%s281 + $0x10] sm:$0xff] %vm1428, %v1369
        %1432 = vst.msk [vmem:[%s281 + $0x18] sm:$0xff] %vm1428, %v1371
        %1433 = vst.msk [vmem:[%s281 + $0x20] sm:$0xff] %vm1428, %v1373
        %1434 = vst.msk [vmem:[%s281 + $0x28] sm:$0xff] %vm1428, %v1375
        %1435 = vst.msk [vmem:[%s281 + $0x30] sm:$0xff] %vm1428, %v1377
        %1436 = vst.msk [vmem:[%s281 + $0x38] sm:$0xff] %vm1428, %v1379
        %1437 = vst.msk [vmem:[%s281 + $0x40] sm:$0xff] %vm1428, %v1381
        %1438 = vst.msk [vmem:[%s281 + $0x48] sm:$0xff] %vm1428, %v1383
        %1439 = vst.msk [vmem:[%s281 + $0x50] sm:$0xff] %vm1428, %v1385
        %1440 = vst.msk [vmem:[%s281 + $0x58] sm:$0xff] %vm1428, %v1387
        %1441 = vst.msk [vmem:[%s281 + $0x60] sm:$0xff] %vm1428, %v1389
        %1442 = vst.msk [vmem:[%s281 + $0x68] sm:$0xff] %vm1428, %v1391
        %1443 = vst.msk [vmem:[%s281 + $0x70] sm:$0xff] %vm1428, %v1393
        %1444 = vst.msk [vmem:[%s281 + $0x78] sm:$0xff] %vm1428, %v1395
        %1445 = vst.msk [vmem:[%s281 + $0x80] sm:$0xff] %vm1428, %v1397
        %1446 = vst.msk [vmem:[%s281 + $0x88] sm:$0xff] %vm1428, %v1399
        %1447 = vst.msk [vmem:[%s281 + $0x90] sm:$0xff] %vm1428, %v1401
        %1448 = vst.msk [vmem:[%s281 + $0x98] sm:$0xff] %vm1428, %v1403
        %1449 = vst.msk [vmem:[%s281 + $0xa0] sm:$0xff] %vm1428, %v1405
        %1450 = vst.msk [vmem:[%s281 + $0xa8] sm:$0xff] %vm1428, %v1407
        %1451 = vst.msk [vmem:[%s281 + $0xb0] sm:$0xff] %vm1428, %v1409
        %1452 = vst.msk [vmem:[%s281 + $0xb8] sm:$0xff] %vm1428, %v1411
        %1453 = vst.msk [vmem:[%s281 + $0xc0] sm:$0xff] %vm1428, %v1413
        %1454 = vst.msk [vmem:[%s281 + $0xc8] sm:$0xff] %vm1428, %v1415
        %1455 = vst.msk [vmem:[%s281 + $0xd0] sm:$0xff] %vm1428, %v1417
        %1456 = vst.msk [vmem:[%s281 + $0xd8] sm:$0xff] %vm1428, %v1419
        %1457 = vst.msk [vmem:[%s281 + $0xe0] sm:$0xff] %vm1428, %v1421
        %1458 = vst.msk [vmem:[%s281 + $0xe8] sm:$0xff] %vm1428, %v1423
        %1459 = vst.msk [vmem:[%s281 + $0xf0] sm:$0xff] %vm1428, %v1425
        %1460 = vst.msk [vmem:[%s281 + $0xf8] sm:$0xff] %vm1428, %v1427
        %s1461 = sand.u32 %s179, 1
        %s1462 = sand.u32 %s179, 1
        %s1463 = smul.addr %s1462, 256
        %s1464 = scalar_lea.vmem [#allocation3], %s1463
        // Predicated region
        $region49: #{_lambda_.1} parent=47 // pred_check
          %p1465 = pneg %p189
        $region50: #{_lambda_.1} parent=47 // pred_check_branch
          %1467 = sbr.rel (%p1465) target = $region52
        $region51: #{_lambda_.1} parent=47 // pred_region
          %s1468 = smul.u32 32, %s19
          %s1469 = ssub.s32 38, %s1468
          %p1470 = scmp.lt.s32.totalorder %s1469, 32
          %s1471 = scalar_select %p1470, %s1469, 32
          %s1472 = smul.u32 128, %s1471
          %p1473 = scmp.ne.s32.totalorder 0, %s1472
          %s1474 = smul.addr %s1468, 8
          %s1475 = scalar_lea.vmem %s7, %s1474
          // Predicated region
          $region53: #{_lambda_.1} parent=51 // pred_check
            %p1476 = pneg %p1473
          $region54: #{_lambda_.1} parent=51 // pred_check_branch
            %1478 = sbr.rel (%p1476) target = $region56
          $region55: #{_lambda_.1} parent=51 // pred_region
            // Predicated region
            $region57: #{_lambda_.1} parent=55 // pred_check
              _
            $region58: #{_lambda_.1} parent=55 // pred_check_branch
              %1480 = sbr.rel (0) target = $region60
            $region59: #{_lambda_.1} parent=55 // pred_region
              // Predicated region
              $region79: #{_lambda_.1} parent=59 // pred_check
                _
              $region80: #{_lambda_.1} parent=59 // pred_check_branch
                %1591 = sbr.rel (0) target = $region82
              $region81: #{_lambda_.1} parent=59 // pred_region
                %s1592 = sshrl.u32 %s1471, 5
                // While loop
                $region83: #{_lambda_.1} parent=81 // loop_pre_header
                  _
                $region84: #{_lambda_.1} parent=81 // loop_header
                  %s1594 = sphi 0, %s1596
                  %p1595 = scmp.ge.s32.totalorder %s1594, %s1592
                  %s1599 = sphi 0, %s1668
                  %s1600 = sphi %s1464, %s1671
                  %s1601 = sphi %s1475, %s1672
                $region85: #{_lambda_.1} parent=81 // loop_header_branch
                  %1598 = sbr.rel (%p1595) target = $region89
                $region86: #{_lambda_.1} parent=81 // loop_body
                  %v1602 = vld [vmem:[%s1600] sm:$0xff]
                  %1603 = vst [vmem:[%s1601] sm:$0xff] %v1602
                  %v1604 = vld [vmem:[%s1600 + $0x8] sm:$0xff]
                  %1605 = vst [vmem:[%s1601 + $0x8] sm:$0xff] %v1604
                  %v1606 = vld [vmem:[%s1600 + $0x10] sm:$0xff]
                  %1607 = vst [vmem:[%s1601 + $0x10] sm:$0xff] %v1606
                  %v1608 = vld [vmem:[%s1600 + $0x18] sm:$0xff]
                  %1609 = vst [vmem:[%s1601 + $0x18] sm:$0xff] %v1608
                  %v1610 = vld [vmem:[%s1600 + $0x20] sm:$0xff]
                  %1611 = vst [vmem:[%s1601 + $0x20] sm:$0xff] %v1610
                  %v1612 = vld [vmem:[%s1600 + $0x28] sm:$0xff]
                  %1613 = vst [vmem:[%s1601 + $0x28] sm:$0xff] %v1612
                  %v1614 = vld [vmem:[%s1600 + $0x30] sm:$0xff]
                  %1615 = vst [vmem:[%s1601 + $0x30] sm:$0xff] %v1614
                  %v1616 = vld [vmem:[%s1600 + $0x38] sm:$0xff]
                  %1617 = vst [vmem:[%s1601 + $0x38] sm:$0xff] %v1616
                  %v1618 = vld [vmem:[%s1600 + $0x40] sm:$0xff]
                  %1619 = vst [vmem:[%s1601 + $0x40] sm:$0xff] %v1618
                  %v1620 = vld [vmem:[%s1600 + $0x48] sm:$0xff]
                  %1621 = vst [vmem:[%s1601 + $0x48] sm:$0xff] %v1620
                  %v1622 = vld [vmem:[%s1600 + $0x50] sm:$0xff]
                  %1623 = vst [vmem:[%s1601 + $0x50] sm:$0xff] %v1622
                  %v1624 = vld [vmem:[%s1600 + $0x58] sm:$0xff]
                  %1625 = vst [vmem:[%s1601 + $0x58] sm:$0xff] %v1624
                  %v1626 = vld [vmem:[%s1600 + $0x60] sm:$0xff]
                  %1627 = vst [vmem:[%s1601 + $0x60] sm:$0xff] %v1626
                  %v1628 = vld [vmem:[%s1600 + $0x68] sm:$0xff]
                  %1629 = vst [vmem:[%s1601 + $0x68] sm:$0xff] %v1628
                  %v1630 = vld [vmem:[%s1600 + $0x70] sm:$0xff]
                  %1631 = vst [vmem:[%s1601 + $0x70] sm:$0xff] %v1630
                  %v1632 = vld [vmem:[%s1600 + $0x78] sm:$0xff]
                  %1633 = vst [vmem:[%s1601 + $0x78] sm:$0xff] %v1632
                  %v1634 = vld [vmem:[%s1600 + $0x80] sm:$0xff]
                  %1635 = vst [vmem:[%s1601 + $0x80] sm:$0xff] %v1634
                  %v1636 = vld [vmem:[%s1600 + $0x88] sm:$0xff]
                  %1637 = vst [vmem:[%s1601 + $0x88] sm:$0xff] %v1636
                  %v1638 = vld [vmem:[%s1600 + $0x90] sm:$0xff]
                  %1639 = vst [vmem:[%s1601 + $0x90] sm:$0xff] %v1638
                  %v1640 = vld [vmem:[%s1600 + $0x98] sm:$0xff]
                  %1641 = vst [vmem:[%s1601 + $0x98] sm:$0xff] %v1640
                  %v1642 = vld [vmem:[%s1600 + $0xa0] sm:$0xff]
                  %1643 = vst [vmem:[%s1601 + $0xa0] sm:$0xff] %v1642
                  %v1644 = vld [vmem:[%s1600 + $0xa8] sm:$0xff]
                  %1645 = vst [vmem:[%s1601 + $0xa8] sm:$0xff] %v1644
                  %v1646 = vld [vmem:[%s1600 + $0xb0] sm:$0xff]
                  %1647 = vst [vmem:[%s1601 + $0xb0] sm:$0xff] %v1646
                  %v1648 = vld [vmem:[%s1600 + $0xb8] sm:$0xff]
                  %1649 = vst [vmem:[%s1601 + $0xb8] sm:$0xff] %v1648
                  %v1650 = vld [vmem:[%s1600 + $0xc0] sm:$0xff]
                  %1651 = vst [vmem:[%s1601 + $0xc0] sm:$0xff] %v1650
                  %v1652 = vld [vmem:[%s1600 + $0xc8] sm:$0xff]
                  %1653 = vst [vmem:[%s1601 + $0xc8] sm:$0xff] %v1652
                  %v1654 = vld [vmem:[%s1600 + $0xd0] sm:$0xff]
                  %1655 = vst [vmem:[%s1601 + $0xd0] sm:$0xff] %v1654
                  %v1656 = vld [vmem:[%s1600 + $0xd8] sm:$0xff]
                  %1657 = vst [vmem:[%s1601 + $0xd8] sm:$0xff] %v1656
                  %v1658 = vld [vmem:[%s1600 + $0xe0] sm:$0xff]
                  %1659 = vst [vmem:[%s1601 + $0xe0] sm:$0xff] %v1658
                  %v1660 = vld [vmem:[%s1600 + $0xe8] sm:$0xff]
                  %1661 = vst [vmem:[%s1601 + $0xe8] sm:$0xff] %v1660
                  %v1662 = vld [vmem:[%s1600 + $0xf0] sm:$0xff]
                  %1663 = vst [vmem:[%s1601 + $0xf0] sm:$0xff] %v1662
                  %v1664 = vld [vmem:[%s1600 + $0xf8] sm:$0xff]
                  %1665 = vst [vmem:[%s1601 + $0xf8] sm:$0xff] %v1664
                  %s1666 = sadd.s32 1, %s1599
                  %p1667 = scmp.ge.s32.totalorder %s1666, %s1592
                  %s1668 = scalar_select %p1667, 0, %s1666
                  %s1669 = smul.u32 %s1668, 256
                  %s1670 = smul.u32 %s1668, 256
                  %s1671 = scalar_lea.vmem %s1464, %s1669 [#allocation3]
                  %s1672 = scalar_lea.vmem %s1475, %s1670
                $region87: #{_lambda_.1} parent=81 // loop_footer
                  %s1596 = sadd.s32 %s1594, 1
                $region88: #{_lambda_.1} parent=81 // loop_footer_branch
                  %1593 = sbr.rel target = $region84
                $region89: #{_lambda_.1} parent=81 // loop_exit
                  _
                %s1673 = sshrl.u32 %s1471, 5
                %s1674 = sand.u32 %s1471, 31
                %s1675 = smul.u32 %s1673, 32
                %s1676 = smul.u32 8, %s1675
                %s1677 = scalar_lea.vmem %s1464, %s1676 [#allocation3]
                %s1678 = smul.u32 8, %s1675
                %s1679 = scalar_lea.vmem %s1475, %s1678
                // While loop
                $region90: #{_lambda_.1} parent=81 // loop_pre_header
                  _
                $region91: #{_lambda_.1} parent=81 // loop_header
                  %s1681 = sphi 0, %s1683
                  %p1682 = scmp.ge.s32.totalorder %s1681, %s1674
                  %s1686 = sphi 0, %s1693
                  %s1687 = sphi %s1677, %s1696
                  %s1688 = sphi %s1679, %s1697
                $region92: #{_lambda_.1} parent=81 // loop_header_branch
                  %1685 = sbr.rel (%p1682) target = $region96
                $region93: #{_lambda_.1} parent=81 // loop_body
                  %v1689 = vld [vmem:[%s1687] sm:$0xff]
                  %1690 = vst [vmem:[%s1688] sm:$0xff] %v1689
                  %s1691 = sadd.s32 1, %s1686
                  %p1692 = scmp.ge.s32.totalorder %s1691, %s1674
                  %s1693 = scalar_select %p1692, 0, %s1691
                  %s1694 = smul.u32 %s1693, 8
                  %s1695 = smul.u32 %s1693, 8
                  %s1696 = scalar_lea.vmem %s1677, %s1694 [#allocation3]
                  %s1697 = scalar_lea.vmem %s1679, %s1695
                $region94: #{_lambda_.1} parent=81 // loop_footer
                  %s1683 = sadd.s32 %s1681, 1
                $region95: #{_lambda_.1} parent=81 // loop_footer_branch
                  %1680 = sbr.rel target = $region91
                $region96: #{_lambda_.1} parent=81 // loop_exit
                  _
              $region82: #{_lambda_.1} parent=59 // pred_fallthru
                _
              // Predicated region
              $region97: #{_lambda_.1} parent=59 // pred_check
                _
              $region98: #{_lambda_.1} parent=59 // pred_check_branch
                %1699 = sbr.rel target = $region100
              $region99: #{_lambda_.1} parent=59 // pred_region
                _
              $region100: #{_lambda_.1} parent=59 // pred_fallthru
                _
            $region60: #{_lambda_.1} parent=55 // pred_fallthru
              _
            // Predicated region
            $region61: #{_lambda_.1} parent=55 // pred_check
              _
            $region62: #{_lambda_.1} parent=55 // pred_check_branch
              %1482 = sbr.rel target = $region64
            $region63: #{_lambda_.1} parent=55 // pred_region
              %s1484 = sshrl.u32 %s1471, 5
              // While loop
              $region65: #{_lambda_.1} parent=63 // loop_pre_header
                _
              $region66: #{_lambda_.1} parent=63 // loop_header
                %s1486 = sphi 0, %s1488
                %p1487 = scmp.ge.s32.totalorder %s1486, %s1484
                %s1491 = sphi 0, %s1560
                %s1492 = sphi %s1464, %s1563
                %s1493 = sphi %s1475, %s1564
              $region67: #{_lambda_.1} parent=63 // loop_header_branch
                %1490 = sbr.rel (%p1487) target = $region71
              $region68: #{_lambda_.1} parent=63 // loop_body
                %v1494 = vld [vmem:[%s1492] sm:$0xff]
                %1495 = vst [vmem:[%s1493] sm:$0xff] %v1494
                %v1496 = vld [vmem:[%s1492 + $0x8] sm:$0xff]
                %1497 = vst [vmem:[%s1493 + $0x8] sm:$0xff] %v1496
                %v1498 = vld [vmem:[%s1492 + $0x10] sm:$0xff]
                %1499 = vst [vmem:[%s1493 + $0x10] sm:$0xff] %v1498
                %v1500 = vld [vmem:[%s1492 + $0x18] sm:$0xff]
                %1501 = vst [vmem:[%s1493 + $0x18] sm:$0xff] %v1500
                %v1502 = vld [vmem:[%s1492 + $0x20] sm:$0xff]
                %1503 = vst [vmem:[%s1493 + $0x20] sm:$0xff] %v1502
                %v1504 = vld [vmem:[%s1492 + $0x28] sm:$0xff]
                %1505 = vst [vmem:[%s1493 + $0x28] sm:$0xff] %v1504
                %v1506 = vld [vmem:[%s1492 + $0x30] sm:$0xff]
                %1507 = vst [vmem:[%s1493 + $0x30] sm:$0xff] %v1506
                %v1508 = vld [vmem:[%s1492 + $0x38] sm:$0xff]
                %1509 = vst [vmem:[%s1493 + $0x38] sm:$0xff] %v1508
                %v1510 = vld [vmem:[%s1492 + $0x40] sm:$0xff]
                %1511 = vst [vmem:[%s1493 + $0x40] sm:$0xff] %v1510
                %v1512 = vld [vmem:[%s1492 + $0x48] sm:$0xff]
                %1513 = vst [vmem:[%s1493 + $0x48] sm:$0xff] %v1512
                %v1514 = vld [vmem:[%s1492 + $0x50] sm:$0xff]
                %1515 = vst [vmem:[%s1493 + $0x50] sm:$0xff] %v1514
                %v1516 = vld [vmem:[%s1492 + $0x58] sm:$0xff]
                %1517 = vst [vmem:[%s1493 + $0x58] sm:$0xff] %v1516
                %v1518 = vld [vmem:[%s1492 + $0x60] sm:$0xff]
                %1519 = vst [vmem:[%s1493 + $0x60] sm:$0xff] %v1518
                %v1520 = vld [vmem:[%s1492 + $0x68] sm:$0xff]
                %1521 = vst [vmem:[%s1493 + $0x68] sm:$0xff] %v1520
                %v1522 = vld [vmem:[%s1492 + $0x70] sm:$0xff]
                %1523 = vst [vmem:[%s1493 + $0x70] sm:$0xff] %v1522
                %v1524 = vld [vmem:[%s1492 + $0x78] sm:$0xff]
                %1525 = vst [vmem:[%s1493 + $0x78] sm:$0xff] %v1524
                %v1526 = vld [vmem:[%s1492 + $0x80] sm:$0xff]
                %1527 = vst [vmem:[%s1493 + $0x80] sm:$0xff] %v1526
                %v1528 = vld [vmem:[%s1492 + $0x88] sm:$0xff]
                %1529 = vst [vmem:[%s1493 + $0x88] sm:$0xff] %v1528
                %v1530 = vld [vmem:[%s1492 + $0x90] sm:$0xff]
                %1531 = vst [vmem:[%s1493 + $0x90] sm:$0xff] %v1530
                %v1532 = vld [vmem:[%s1492 + $0x98] sm:$0xff]
                %1533 = vst [vmem:[%s1493 + $0x98] sm:$0xff] %v1532
                %v1534 = vld [vmem:[%s1492 + $0xa0] sm:$0xff]
                %1535 = vst [vmem:[%s1493 + $0xa0] sm:$0xff] %v1534
                %v1536 = vld [vmem:[%s1492 + $0xa8] sm:$0xff]
                %1537 = vst [vmem:[%s1493 + $0xa8] sm:$0xff] %v1536
                %v1538 = vld [vmem:[%s1492 + $0xb0] sm:$0xff]
                %1539 = vst [vmem:[%s1493 + $0xb0] sm:$0xff] %v1538
                %v1540 = vld [vmem:[%s1492 + $0xb8] sm:$0xff]
                %1541 = vst [vmem:[%s1493 + $0xb8] sm:$0xff] %v1540
                %v1542 = vld [vmem:[%s1492 + $0xc0] sm:$0xff]
                %1543 = vst [vmem:[%s1493 + $0xc0] sm:$0xff] %v1542
                %v1544 = vld [vmem:[%s1492 + $0xc8] sm:$0xff]
                %1545 = vst [vmem:[%s1493 + $0xc8] sm:$0xff] %v1544
                %v1546 = vld [vmem:[%s1492 + $0xd0] sm:$0xff]
                %1547 = vst [vmem:[%s1493 + $0xd0] sm:$0xff] %v1546
                %v1548 = vld [vmem:[%s1492 + $0xd8] sm:$0xff]
                %1549 = vst [vmem:[%s1493 + $0xd8] sm:$0xff] %v1548
                %v1550 = vld [vmem:[%s1492 + $0xe0] sm:$0xff]
                %1551 = vst [vmem:[%s1493 + $0xe0] sm:$0xff] %v1550
                %v1552 = vld [vmem:[%s1492 + $0xe8] sm:$0xff]
                %1553 = vst [vmem:[%s1493 + $0xe8] sm:$0xff] %v1552
                %v1554 = vld [vmem:[%s1492 + $0xf0] sm:$0xff]
                %1555 = vst [vmem:[%s1493 + $0xf0] sm:$0xff] %v1554
                %v1556 = vld [vmem:[%s1492 + $0xf8] sm:$0xff]
                %1557 = vst [vmem:[%s1493 + $0xf8] sm:$0xff] %v1556
                %s1558 = sadd.s32 1, %s1491
                %p1559 = scmp.ge.s32.totalorder %s1558, %s1484
                %s1560 = scalar_select %p1559, 0, %s1558
                %s1561 = smul.u32 %s1560, 256
                %s1562 = smul.u32 %s1560, 256
                %s1563 = scalar_lea.vmem %s1464, %s1561 [#allocation3]
                %s1564 = scalar_lea.vmem %s1475, %s1562
              $region69: #{_lambda_.1} parent=63 // loop_footer
                %s1488 = sadd.s32 %s1486, 1
              $region70: #{_lambda_.1} parent=63 // loop_footer_branch
                %1485 = sbr.rel target = $region66
              $region71: #{_lambda_.1} parent=63 // loop_exit
                _
              %s1565 = sshrl.u32 %s1471, 5
              %s1566 = sand.u32 %s1471, 31
              %s1567 = smul.u32 %s1565, 32
              %s1568 = smul.u32 8, %s1567
              %s1569 = scalar_lea.vmem %s1464, %s1568 [#allocation3]
              %s1570 = smul.u32 8, %s1567
              %s1571 = scalar_lea.vmem %s1475, %s1570
              // While loop
              $region72: #{_lambda_.1} parent=63 // loop_pre_header
                _
              $region73: #{_lambda_.1} parent=63 // loop_header
                %s1573 = sphi 0, %s1575
                %p1574 = scmp.ge.s32.totalorder %s1573, %s1566
                %s1578 = sphi 0, %s1585
                %s1579 = sphi %s1569, %s1588
                %s1580 = sphi %s1571, %s1589
              $region74: #{_lambda_.1} parent=63 // loop_header_branch
                %1577 = sbr.rel (%p1574) target = $region78
              $region75: #{_lambda_.1} parent=63 // loop_body
                %v1581 = vld [vmem:[%s1579] sm:$0xff]
                %1582 = vst [vmem:[%s1580] sm:$0xff] %v1581
                %s1583 = sadd.s32 1, %s1578
                %p1584 = scmp.ge.s32.totalorder %s1583, %s1566
                %s1585 = scalar_select %p1584, 0, %s1583
                %s1586 = smul.u32 %s1585, 8
                %s1587 = smul.u32 %s1585, 8
                %s1588 = scalar_lea.vmem %s1569, %s1586 [#allocation3]
                %s1589 = scalar_lea.vmem %s1571, %s1587
              $region76: #{_lambda_.1} parent=63 // loop_footer
                %s1575 = sadd.s32 %s1573, 1
              $region77: #{_lambda_.1} parent=63 // loop_footer_branch
                %1572 = sbr.rel target = $region73
              $region78: #{_lambda_.1} parent=63 // loop_exit
                _
            $region64: #{_lambda_.1} parent=55 // pred_fallthru
              _
          $region56: #{_lambda_.1} parent=51 // pred_fallthru
            _
          %1700 = vnop
        $region52: #{_lambda_.1} parent=47 // pred_fallthru
          _
      $region48: #{_lambda_.1} parent=5 // pred_fallthru
        _
      %p1701 = scmp.le.s32.totalorder 2, %s14
      // Predicated region
      $region101: #{_lambda_.1} parent=5 // pred_check
        %p1702 = pneg %p1701
      $region102: #{_lambda_.1} parent=5 // pred_check_branch
        %1704 = sbr.rel (%p1702) target = $region104
      $region103: #{_lambda_.1} parent=5 // pred_region
        %s1705 = ssub.s32 %s14, 2
        // Predicated region
        $region105: #{_lambda_.1} parent=103 // pred_check
          %p1706 = pneg %p195
        $region106: #{_lambda_.1} parent=103 // pred_check_branch
          %1708 = sbr.rel (%p1706) target = $region108
        $region107: #{_lambda_.1} parent=103 // pred_region
          %s1709 = sand.u32 %s180, 1
          %s1710 = sand.u32 %s180, 1
          %s1711 = smul.addr %s1710, 256
          %s1712 = scalar_lea.vmem [#allocation3], %s1711
        $region108: #{_lambda_.1} parent=103 // pred_fallthru
          _
      $region104: #{_lambda_.1} parent=5 // pred_fallthru
        _
    $region6: #{_lambda_.1} parent=1 // loop_footer
      %s18 = sadd.s32 1, %s14
    $region7: #{_lambda_.1} parent=1 // loop_footer_branch
      %13 = sbr.rel target = $region3
    $region8: #{_lambda_.1} parent=1 // loop_exit
      _

</llo_original>
